<compile_context>
chip_gen: v5e
topology: v5e:2x2
jax: 0.10.0
libtpu: 0.0.40
codegen_flags: <defaults>
</compile_context>

<pallas_src>
import functools

import jax
import jax.numpy as jnp
import numpy as np
from jax.experimental import pallas as pl
from jax.experimental.pallas import tpu as pltpu


# ----------------------------------------------------------------------------
# Fused Pallas kernel: one grid step == one batch element.
# ----------------------------------------------------------------------------
def _mhco_kernel(x1_ref, x2_ref,
                 wk1_ref, bk1_ref, wv1_ref, bv1_ref,
                 wk2_ref, bk2_ref, wv2_ref, bv2_ref,
                 wf12_ref, bf12_ref, wf21_ref, bf21_ref,
                 wp12a_ref, wp12b_ref, bp12_ref,
                 wp21a_ref, wp21b_ref, bp21_ref,
                 out21_ref, out12_ref,
                 scores_scr, ctx12t_scr, ctx21_scr,
                 *, head_count, dim_per_head):
    f32, bf16 = jnp.float32, jnp.bfloat16
    H, dh = head_count, dim_per_head

    x1 = x1_ref[...]                                   # (L1, D1) bf16
    x2 = x2_ref[...]                                   # (L2, D2) bf16
    L1, L2 = x1.shape[0], x2.shape[0]

    def linear(x, w_ref, b_ref):                       # bf16 MXU, f32 accumulate
        return jnp.dot(x, w_ref[...], preferred_element_type=f32) + b_ref[...]

    k1 = linear(x1, wk1_ref, bk1_ref)                  # (L1, M) f32
    v1 = linear(x1, wv1_ref, bv1_ref)                  # (L1, M) f32
    k2 = linear(x2, wk2_ref, bk2_ref)                  # (L2, M) f32
    v2 = linear(x2, wv2_ref, bv2_ref)                  # (L2, M) f32

    # Hoisted transposes: one XLU transpose per tensor instead of one per head.
    k1b = k1.astype(bf16)                              # (L1, M)
    k2tb = jnp.transpose(k2).astype(bf16)              # (M, L2)
    v1tb = jnp.transpose(v1).astype(bf16)              # (M, L1)
    v2b = v2.astype(bf16)                              # (L2, M)

    # Pass 1 (per head): scores -> VMEM scratch, running head-max for the
    # dist_2_to_1 (head-axis) softmax, and the full 1->2 path for this head
    # (its lane-axis softmax only needs this head's scores).  Every matmul
    # contracts lane(lhs) x sublane(rhs): no per-head transpose.
    # s_h[k, q] == torch scores[b, h, q, k]  (k over L1, q over L2).
    m21 = jnp.full((L1, L2), -jnp.inf, f32)
    for h in range(H):
        hs = slice(h * dh, (h + 1) * dh)
        s_h = jnp.dot(k1b[:, hs], k2tb[hs, :],
                      preferred_element_type=f32)      # (L1, L2)
        scores_scr[h] = s_h
        m21 = jnp.maximum(m21, s_h)
        # softmax over L2 (lane axis) == torch softmax(scores, dim=2)
        e = jnp.exp(s_h - jnp.max(s_h, axis=1, keepdims=True))
        d12 = e * pl.reciprocal(jnp.sum(e, axis=1, keepdims=True), approx=True)
        # c12_h^T = v1_h^T @ d12; heads land sublane-contiguously in the
        # (M, L2) buffer, so this IS the "unshape" (in transposed layout).
        ctx12t_scr[hs, :] = jnp.dot(v1tb[hs, :], d12.astype(bf16),
                                    preferred_element_type=f32)   # (dh, L2)

    # Pass 2 (per head): head-axis softmax numerators, written back IN PLACE
    # (exp reuses the scores scratch -> half the live set).
    sum21 = jnp.zeros((L1, L2), f32)
    for h in range(H):
        e = jnp.exp(scores_scr[h] - m21)
        scores_scr[h] = e
        sum21 = sum21 + e
    r21 = pl.reciprocal(sum21, approx=True)

    # Pass 3 (per head): 2->1 weighted values; lane-contiguous head slices of
    # the (L1, M) buffer == "unshape" with no relayout.
    for h in range(H):
        hs = slice(h * dh, (h + 1) * dh)
        d21 = (scores_scr[h] * r21).astype(bf16)       # (L1, L2)
        ctx21_scr[:, hs] = jnp.dot(d21, v2b[:, hs],
                                   preferred_element_type=f32)    # (L1, dh)

    # Full-K final linears: a single (L, M) x (M, M) MXU pass per direction
    # (instead of H underfilled K=dh passes).
    ctx12 = jnp.transpose(ctx12t_scr[...]).astype(bf16)           # (L2, M)
    c12f = (jnp.dot(ctx12, wf12_ref[...], preferred_element_type=f32)
            + bf12_ref[...])                                      # (L2, M) f32
    ctx21 = ctx21_scr[...].astype(bf16)                           # (L1, M)
    c21f = (jnp.dot(ctx21, wf21_ref[...], preferred_element_type=f32)
            + bf21_ref[...])                                      # (L1, M) f32

    # Concat-free projections: cat([ctx, context]) @ Wp^T == ctx@Wa + context@Wb.
    seq12 = jnp.tanh(
        jnp.dot(x2, wp12a_ref[...], preferred_element_type=f32)
        + jnp.dot(c12f.astype(bf16), wp12b_ref[...], preferred_element_type=f32)
        + bp12_ref[...])
    seq21 = jnp.tanh(
        jnp.dot(x1, wp21a_ref[...], preferred_element_type=f32)
        + jnp.dot(c21f.astype(bf16), wp21b_ref[...], preferred_element_type=f32)
        + bp21_ref[...])

    out12_ref[...] = seq12.astype(out12_ref.dtype)     # (L2, M) lane-dense
    out21_ref[...] = seq21.astype(out21_ref.dtype)     # (L1, M) lane-dense


# ----------------------------------------------------------------------------
# Parameter plumbing (PyTorch nn.Linear convention: W (Dout, Din), b (Dout,))
# ----------------------------------------------------------------------------
def init_params(key, ctx_1_dim, ctx_2_dim, bottleneck):
    keys = jax.random.split(key, 16)
    scale = 0.05

    def lin(i, din, dout):
        w = scale * jax.random.normal(keys[2 * i], (dout, din), jnp.float32)
        b = scale * jax.random.normal(keys[2 * i + 1], (dout,), jnp.float32)
        return w, b

    p = {}
    p["linear_keys_1"] = lin(0, ctx_1_dim, bottleneck)
    p["linear_values_1"] = lin(1, ctx_1_dim, bottleneck)
    p["linear_keys_2"] = lin(2, ctx_2_dim, bottleneck)
    p["linear_values_2"] = lin(3, ctx_2_dim, bottleneck)
    p["final_1_to_2_linear"] = lin(4, bottleneck, bottleneck)
    p["final_2_to_1_linear"] = lin(5, bottleneck, bottleneck)
    p["project_1_to_2"] = lin(6, ctx_1_dim + ctx_2_dim, bottleneck)
    p["project_2_to_1"] = lin(7, ctx_1_dim + ctx_2_dim, bottleneck)
    return p


def prepare_kernel_params(params, ctx_1_dim, ctx_2_dim):
    """Pre-transpose weights to (Din, Dout) bf16, split project weights, f32 biases."""
    bf16 = jnp.bfloat16

    def t(name):
        w, b = params[name]
        return jnp.transpose(w).astype(bf16), b.reshape(1, -1).astype(jnp.float32)

    wk1, bk1 = t("linear_keys_1")
    wv1, bv1 = t("linear_values_1")
    wk2, bk2 = t("linear_keys_2")
    wv2, bv2 = t("linear_values_2")
    wf12, bf12 = t("final_1_to_2_linear")
    wf21, bf21 = t("final_2_to_1_linear")
    wp12, bp12 = params["project_1_to_2"]
    wp21, bp21 = params["project_2_to_1"]
    wp12a = jnp.transpose(wp12[:, :ctx_2_dim]).astype(bf16)   # acts on ctx_2
    wp12b = jnp.transpose(wp12[:, ctx_2_dim:]).astype(bf16)   # acts on context_1_to_2
    wp21a = jnp.transpose(wp21[:, :ctx_1_dim]).astype(bf16)   # acts on ctx_1
    wp21b = jnp.transpose(wp21[:, ctx_1_dim:]).astype(bf16)   # acts on context_2_to_1
    return [wk1, bk1, wv1, bv1, wk2, bk2, wv2, bv2,
            wf12, bf12, wf21, bf21,
            wp12a, wp12b, bp12.reshape(1, -1).astype(jnp.float32),
            wp21a, wp21b, bp21.reshape(1, -1).astype(jnp.float32)]


def mhco_forward(params, ctx_1, ctx_2, head_count):
    """ctx_1: (L1, B, D1), ctx_2: (L2, B, D2) -> (seq_2_to_1, seq_1_to_2)."""
    L1, B, D1 = ctx_1.shape
    L2, _, D2 = ctx_2.shape
    M = params["linear_keys_1"][0].shape[0]        # bottleneck
    dh = M // head_count

    weights = prepare_kernel_params(params, D1, D2)

    # Batch-major bf16 kernel operands.  Transpose + cast is one fused XLA copy
    # (f32 in, bf16 out -> less HBM traffic than an f32 transpose alone), and
    # allow_input_fusion below permits XLA to fold it into the pallas_call.
    # (A squeezed-batch BlockSpec on the raw (L, B, D) tensors would place a
    # size-1 block in the second-minor dim, violating the (8,128) tiling rule.)
    x1 = jnp.transpose(ctx_1, (1, 0, 2)).astype(jnp.bfloat16)   # (B, L1, D1)
    x2 = jnp.transpose(ctx_2, (1, 0, 2)).astype(jnp.bfloat16)   # (B, L2, D2)

    kernel = functools.partial(_mhco_kernel, head_count=head_count,
                               dim_per_head=dh)

    def batched(l, d):
        return pl.BlockSpec((None, l, d), lambda b: (b, 0, 0))

    def resident(shape):
        # Constant block index -> stays VMEM-resident across grid steps.
        return pl.BlockSpec(shape, lambda b: (0, 0))

    in_specs = ([batched(L1, D1), batched(L2, D2)]
                + [resident(w.shape) for w in weights])

    # Explicit VMEM budget (v7x: 64 MiB physical / 32 MiB default scoped).
    lane = 128
    weight_bytes = sum(int(np.prod(w.shape)) * w.dtype.itemsize for w in weights)
    act_bytes = 2 * 2 * (L1 * D1 + L2 * D2)                 # bf16, double-buffered
    out_bytes = 2 * 4 * (L1 + L2) * M
    scratch_bytes = 4 * (head_count * L1 * max(L2, lane)
                         + M * max(L2, lane) + L1 * max(M, lane))
    vmem_limit = int(min(100 * 2**20,
                         max(32 * 2**20,
                             2 * (weight_bytes + act_bytes + out_bytes
                                  + scratch_bytes))))

    flops = 2 * B * (2 * L1 * D1 * M + 2 * L2 * D2 * M
                     + 3 * L1 * L2 * M
                     + (L1 + L2) * M * M
                     + L2 * (D2 + M) * M + L1 * (D1 + M) * M)
    transcendentals = B * (3 * head_count * L1 * L2 + (L1 + L2) * M)
    bytes_accessed = (2 * B * (L1 * D1 + L2 * D2) + weight_bytes
                      + 4 * B * (L1 + L2) * M)

    out21, out12 = pl.pallas_call(
        kernel,
        grid=(B,),
        in_specs=in_specs,
        out_specs=[batched(L1, M), batched(L2, M)],
        out_shape=[jax.ShapeDtypeStruct((B, L1, M), jnp.float32),
                   jax.ShapeDtypeStruct((B, L2, M), jnp.float32)],
        scratch_shapes=[pltpu.VMEM((head_count, L1, L2), jnp.float32),
                        pltpu.VMEM((M, L2), jnp.float32),
                        pltpu.VMEM((L1, M), jnp.float32)],
        compiler_params=pltpu.CompilerParams(
            dimension_semantics=("parallel",),
            vmem_limit_bytes=vmem_limit,
            allow_input_fusion=[True, True] + [False] * len(weights)),
        cost_estimate=pl.CostEstimate(flops=int(flops),
                                      transcendentals=int(transcendentals),
                                      bytes_accessed=int(bytes_accessed)),
    )(x1, x2, *weights)

    seq_2_to_1 = jnp.transpose(out21, (1, 0, 2))   # (L1, B, M) time-major
    seq_1_to_2 = jnp.transpose(out12, (1, 0, 2))   # (L2, B, M)
    return seq_2_to_1, seq_1_to_2


# ----------------------------------------------------------------------------
# Pure-JAX f32 reference (mirrors the PyTorch forward) for validation
# ----------------------------------------------------------------------------
def mhco_reference(params, ctx_1, ctx_2, head_count):
    L1, B, _ = ctx_1.shape
    L2 = ctx_2.shape[0]
    M = params["linear_keys_1"][0].shape[0]
    dh = M // head_count

    def lin(x, wb):
        w, b = wb
        return x @ w.T + b

    def shape(x, length):
        return jnp.transpose(x.reshape(length, B, head_count, dh), (1, 2, 0, 3))

    def unshape(x, length):
        y = jnp.transpose(x, (0, 2, 1, 3)).reshape(B, length, M)
        return jnp.transpose(y, (1, 0, 2))

    key_1_up = shape(lin(ctx_1, params["linear_keys_1"]), L1)
    value_1_up = shape(lin(ctx_1, params["linear_values_1"]), L1)
    key_2_up = shape(lin(ctx_2, params["linear_keys_2"]), L2)
    value_2_up = shape(lin(ctx_2, params["linear_values_2"]), L2)

    scores = jnp.einsum("bhqd,bhkd->bhqk", key_2_up, key_1_up)   # (B,H,L2,L1)

    d12 = jax.nn.softmax(scores, axis=2)
    c12 = unshape(jnp.einsum("bhqk,bhkd->bhqd", d12, value_1_up), L2)
    c12 = lin(c12, params["final_1_to_2_linear"])
    seq_1_to_2 = jnp.tanh(lin(jnp.concatenate([ctx_2, c12], axis=-1),
                              params["project_1_to_2"]))

    d21 = jax.nn.softmax(scores, axis=1)
    c21 = unshape(jnp.einsum("bhqk,bhqd->bhkd", d21, value_2_up), L1)
    c21 = lin(c21, params["final_2_to_1_linear"])
    seq_2_to_1 = jnp.tanh(lin(jnp.concatenate([ctx_1, c21], axis=-1),
                              params["project_2_to_1"]))
    return seq_2_to_1, seq_1_to_2


# ----------------------------------------------------------------------------
if __name__ == "__main__":
    # The reference module's concat+project step implies ctx_1_dim == ctx_2_dim == bottleneck.
    # bottleneck = 128 keeps every output store / bias add lane-dense.
    B, L1, L2 = 2, 16, 8
    ctx_1_dim = ctx_2_dim = bottleneck = 128
    head_count = 4                                   # dim_per_head = 32

    key = jax.random.PRNGKey(0)
    k_p, k_c1, k_c2 = jax.random.split(key, 3)
    params = init_params(k_p, ctx_1_dim, ctx_2_dim, bottleneck)
    ctx_1 = jax.random.normal(k_c1, (L1, B, ctx_1_dim), jnp.float32)
    ctx_2 = jax.random.normal(k_c2, (L2, B, ctx_2_dim), jnp.float32)

    fwd = jax.jit(functools.partial(mhco_forward, head_count=head_count))
    seq_2_to_1, seq_1_to_2 = fwd(params, ctx_1, ctx_2)
    jax.block_until_ready((seq_2_to_1, seq_1_to_2))

    ref_2_to_1, ref_1_to_2 = mhco_reference(params, ctx_1, ctx_2, head_count)
    # Tolerance covers bf16 MXU operands + approximate softmax reciprocal
    # against the exact f32 reference.
    np.testing.assert_allclose(np.asarray(seq_2_to_1), np.asarray(ref_2_to_1),
                               rtol=5e-2, atol=3e-2)
    np.testing.assert_allclose(np.asarray(seq_1_to_2), np.asarray(ref_1_to_2),
                               rtol=5e-2, atol=3e-2)
    assert seq_2_to_1.shape == (L1, B, bottleneck)
    assert seq_1_to_2.shape == (L2, B, bottleneck)

    print("KERNEL_OK")
</pallas_src>

<mosaic_0001>
module attributes {stable_mosaic.version = 11 : i64} {
  func.func @_mhco_kernel(%arg0: i32, %arg1: memref<1x16x128xbf16, #tpu.memory_space<vmem>>, %arg2: memref<1x8x128xbf16, #tpu.memory_space<vmem>>, %arg3: memref<128x128xbf16, #tpu.memory_space<vmem>>, %arg4: memref<1x128xf32, #tpu.memory_space<vmem>>, %arg5: memref<128x128xbf16, #tpu.memory_space<vmem>>, %arg6: memref<1x128xf32, #tpu.memory_space<vmem>>, %arg7: memref<128x128xbf16, #tpu.memory_space<vmem>>, %arg8: memref<1x128xf32, #tpu.memory_space<vmem>>, %arg9: memref<128x128xbf16, #tpu.memory_space<vmem>>, %arg10: memref<1x128xf32, #tpu.memory_space<vmem>>, %arg11: memref<128x128xbf16, #tpu.memory_space<vmem>>, %arg12: memref<1x128xf32, #tpu.memory_space<vmem>>, %arg13: memref<128x128xbf16, #tpu.memory_space<vmem>>, %arg14: memref<1x128xf32, #tpu.memory_space<vmem>>, %arg15: memref<128x128xbf16, #tpu.memory_space<vmem>>, %arg16: memref<128x128xbf16, #tpu.memory_space<vmem>>, %arg17: memref<1x128xf32, #tpu.memory_space<vmem>>, %arg18: memref<128x128xbf16, #tpu.memory_space<vmem>>, %arg19: memref<128x128xbf16, #tpu.memory_space<vmem>>, %arg20: memref<1x128xf32, #tpu.memory_space<vmem>>, %arg21: memref<1x16x128xf32, #tpu.memory_space<vmem>>, %arg22: memref<1x8x128xf32, #tpu.memory_space<vmem>>, %arg23: memref<4x16x8xf32, #tpu.memory_space<vmem>>, %arg24: memref<128x8xf32, #tpu.memory_space<vmem>>, %arg25: memref<16x128xf32, #tpu.memory_space<vmem>>) attributes {dimension_semantics = [#tpu.dimension_semantics<parallel>], iteration_bounds = array<i64: 2>, scalar_prefetch = 0 : i64, scratch_operands = 3 : i64, tpu.core_type = #tpu.core_type<tc>, window_params = [{transform_indices = @transform_0, window_bounds = array<i64: 1, 16, 128>}, {transform_indices = @transform_1, window_bounds = array<i64: 1, 8, 128>}, {pipeline_mode = #tpu.pipeline_mode<synchronous>, transform_indices = @transform_2, window_bounds = array<i64: 128, 128>}, {pipeline_mode = #tpu.pipeline_mode<synchronous>, transform_indices = @transform_3, window_bounds = array<i64: 1, 128>}, {pipeline_mode = #tpu.pipeline_mode<synchronous>, transform_indices = @transform_4, window_bounds = array<i64: 128, 128>}, {pipeline_mode = #tpu.pipeline_mode<synchronous>, transform_indices = @transform_5, window_bounds = array<i64: 1, 128>}, {pipeline_mode = #tpu.pipeline_mode<synchronous>, transform_indices = @transform_6, window_bounds = array<i64: 128, 128>}, {pipeline_mode = #tpu.pipeline_mode<synchronous>, transform_indices = @transform_7, window_bounds = array<i64: 1, 128>}, {pipeline_mode = #tpu.pipeline_mode<synchronous>, transform_indices = @transform_8, window_bounds = array<i64: 128, 128>}, {pipeline_mode = #tpu.pipeline_mode<synchronous>, transform_indices = @transform_9, window_bounds = array<i64: 1, 128>}, {pipeline_mode = #tpu.pipeline_mode<synchronous>, transform_indices = @transform_10, window_bounds = array<i64: 128, 128>}, {pipeline_mode = #tpu.pipeline_mode<synchronous>, transform_indices = @transform_11, window_bounds = array<i64: 1, 128>}, {pipeline_mode = #tpu.pipeline_mode<synchronous>, transform_indices = @transform_12, window_bounds = array<i64: 128, 128>}, {pipeline_mode = #tpu.pipeline_mode<synchronous>, transform_indices = @transform_13, window_bounds = array<i64: 1, 128>}, {pipeline_mode = #tpu.pipeline_mode<synchronous>, transform_indices = @transform_14, window_bounds = array<i64: 128, 128>}, {pipeline_mode = #tpu.pipeline_mode<synchronous>, transform_indices = @transform_15, window_bounds = array<i64: 128, 128>}, {pipeline_mode = #tpu.pipeline_mode<synchronous>, transform_indices = @transform_16, window_bounds = array<i64: 1, 128>}, {pipeline_mode = #tpu.pipeline_mode<synchronous>, transform_indices = @transform_17, window_bounds = array<i64: 128, 128>}, {pipeline_mode = #tpu.pipeline_mode<synchronous>, transform_indices = @transform_18, window_bounds = array<i64: 128, 128>}, {pipeline_mode = #tpu.pipeline_mode<synchronous>, transform_indices = @transform_19, window_bounds = array<i64: 1, 128>}, {transform_indices = @transform_20, window_bounds = array<i64: 1, 16, 128>}, {transform_indices = @transform_21, window_bounds = array<i64: 1, 8, 128>}]} {
    %c0 = arith.constant 0 : index
    %c0_0 = arith.constant 0 : index
    %c0_1 = arith.constant 0 : index
    %0 = vector.load %arg1[%c0, %c0_0, %c0_1] : memref<1x16x128xbf16, #tpu.memory_space<vmem>>, vector<1x16x128xbf16>
    %1 = vector.shape_cast %0 : vector<1x16x128xbf16> to vector<16x128xbf16>
    %c0_2 = arith.constant 0 : index
    %c0_3 = arith.constant 0 : index
    %c0_4 = arith.constant 0 : index
    %2 = vector.load %arg2[%c0_2, %c0_3, %c0_4] : memref<1x8x128xbf16, #tpu.memory_space<vmem>>, vector<1x8x128xbf16>
    %3 = vector.shape_cast %2 : vector<1x8x128xbf16> to vector<8x128xbf16>
    %c0_5 = arith.constant 0 : index
    %c0_6 = arith.constant 0 : index
    %4 = vector.load %arg3[%c0_5, %c0_6] : memref<128x128xbf16, #tpu.memory_space<vmem>>, vector<128x128xbf16>
    %cst = arith.constant dense<0.000000e+00> : vector<16x128xf32>
    %5 = tpu.matmul %1, %4, %cst {dimension_numbers = #tpu.dot_dimension_numbers<[1], [0], [0], [1], [0, 0, 1, 1], [], []>} : vector<16x128xbf16>, vector<128x128xbf16>, vector<16x128xf32> -> vector<16x128xf32>
    %c0_7 = arith.constant 0 : index
    %c0_8 = arith.constant 0 : index
    %6 = vector.load %arg4[%c0_7, %c0_8] : memref<1x128xf32, #tpu.memory_space<vmem>>, vector<1x128xf32>
    %7 = vector.broadcast %6 : vector<1x128xf32> to vector<16x128xf32>
    %8 = arith.addf %5, %7 : vector<16x128xf32>
    %c0_9 = arith.constant 0 : index
    %c0_10 = arith.constant 0 : index
    %9 = vector.load %arg5[%c0_9, %c0_10] : memref<128x128xbf16, #tpu.memory_space<vmem>>, vector<128x128xbf16>
    %cst_11 = arith.constant dense<0.000000e+00> : vector<16x128xf32>
    %10 = tpu.matmul %1, %9, %cst_11 {dimension_numbers = #tpu.dot_dimension_numbers<[1], [0], [0], [1], [0, 0, 1, 1], [], []>} : vector<16x128xbf16>, vector<128x128xbf16>, vector<16x128xf32> -> vector<16x128xf32>
    %c0_12 = arith.constant 0 : index
    %c0_13 = arith.constant 0 : index
    %11 = vector.load %arg6[%c0_12, %c0_13] : memref<1x128xf32, #tpu.memory_space<vmem>>, vector<1x128xf32>
    %12 = vector.broadcast %11 : vector<1x128xf32> to vector<16x128xf32>
    %13 = arith.addf %10, %12 : vector<16x128xf32>
    %c0_14 = arith.constant 0 : index
    %c0_15 = arith.constant 0 : index
    %14 = vector.load %arg7[%c0_14, %c0_15] : memref<128x128xbf16, #tpu.memory_space<vmem>>, vector<128x128xbf16>
    %cst_16 = arith.constant dense<0.000000e+00> : vector<8x128xf32>
    %15 = tpu.matmul %3, %14, %cst_16 {dimension_numbers = #tpu.dot_dimension_numbers<[1], [0], [0], [1], [0, 0, 1, 1], [], []>} : vector<8x128xbf16>, vector<128x128xbf16>, vector<8x128xf32> -> vector<8x128xf32>
    %c0_17 = arith.constant 0 : index
    %c0_18 = arith.constant 0 : index
    %16 = vector.load %arg8[%c0_17, %c0_18] : memref<1x128xf32, #tpu.memory_space<vmem>>, vector<1x128xf32>
    %17 = vector.broadcast %16 : vector<1x128xf32> to vector<8x128xf32>
    %18 = arith.addf %15, %17 : vector<8x128xf32>
    %c0_19 = arith.constant 0 : index
    %c0_20 = arith.constant 0 : index
    %19 = vector.load %arg9[%c0_19, %c0_20] : memref<128x128xbf16, #tpu.memory_space<vmem>>, vector<128x128xbf16>
    %cst_21 = arith.constant dense<0.000000e+00> : vector<8x128xf32>
    %20 = tpu.matmul %3, %19, %cst_21 {dimension_numbers = #tpu.dot_dimension_numbers<[1], [0], [0], [1], [0, 0, 1, 1], [], []>} : vector<8x128xbf16>, vector<128x128xbf16>, vector<8x128xf32> -> vector<8x128xf32>
    %c0_22 = arith.constant 0 : index
    %c0_23 = arith.constant 0 : index
    %21 = vector.load %arg10[%c0_22, %c0_23] : memref<1x128xf32, #tpu.memory_space<vmem>>, vector<1x128xf32>
    %22 = vector.broadcast %21 : vector<1x128xf32> to vector<8x128xf32>
    %23 = arith.addf %20, %22 : vector<8x128xf32>
    %24 = arith.truncf %8 : vector<16x128xf32> to vector<16x128xbf16>
    %25 = tpu.transpose %18, [1, 0] : vector<8x128xf32> -> vector<128x8xf32>
    %26 = arith.truncf %25 : vector<128x8xf32> to vector<128x8xbf16>
    %27 = tpu.transpose %13, [1, 0] : vector<16x128xf32> -> vector<128x16xf32>
    %28 = arith.truncf %27 : vector<128x16xf32> to vector<128x16xbf16>
    %29 = arith.truncf %23 : vector<8x128xf32> to vector<8x128xbf16>
    %cst_24 = arith.constant 0xFF800000 : f32
    %30 = vector.broadcast %cst_24 : f32 to vector<16x8xf32>
    %31 = vector.extract_strided_slice %24 {offsets = [0, 0], sizes = [16, 32], strides = [1, 1]} : vector<16x128xbf16> to vector<16x32xbf16>
    %32 = vector.extract_strided_slice %26 {offsets = [0, 0], sizes = [32, 8], strides = [1, 1]} : vector<128x8xbf16> to vector<32x8xbf16>
    %cst_25 = arith.constant dense<0.000000e+00> : vector<16x8xf32>
    %33 = tpu.matmul %31, %32, %cst_25 {dimension_numbers = #tpu.dot_dimension_numbers<[1], [0], [0], [1], [0, 0, 1, 1], [], []>} : vector<16x32xbf16>, vector<32x8xbf16>, vector<16x8xf32> -> vector<16x8xf32>
    %c0_26 = arith.constant 0 : index
    %c0_27 = arith.constant 0 : index
    %c0_28 = arith.constant 0 : index
    %34 = vector.load %arg23[%c0_26, %c0_27, %c0_28] : memref<4x16x8xf32, #tpu.memory_space<vmem>>, vector<1x16x8xf32>
    %35 = vector.shape_cast %34 : vector<1x16x8xf32> to vector<16x8xf32>
    %36 = vector.shape_cast %33 : vector<16x8xf32> to vector<1x16x8xf32>
    tpu.vector_store %arg23[%c0_26, %c0_27, %c0_28], %36 {strides = array<i32>} : memref<4x16x8xf32, #tpu.memory_space<vmem>>, vector<1x16x8xf32>,
    %37 = arith.maximumf %30, %33 : vector<16x8xf32>
    %cst_29 = arith.constant dense<0xFF800000> : vector<16xf32>
    %38 = vector.multi_reduction <maximumf>, %33, %cst_29 [1] : vector<16x8xf32> to vector<16xf32>
    %39 = vector.shape_cast %38 : vector<16xf32> to vector<16x1xf32>
    %40 = vector.broadcast %39 : vector<16x1xf32> to vector<16x8xf32>
    %41 = arith.subf %33, %40 : vector<16x8xf32>
    %42 = math.exp %41 : vector<16x8xf32>
    %cst_30 = arith.constant dense<0.000000e+00> : vector<16xf32>
    %43 = vector.multi_reduction <add>, %42, %cst_30 [1] : vector<16x8xf32> to vector<16xf32>
    %44 = vector.shape_cast %43 : vector<16xf32> to vector<16x1xf32>
    %45 = tpu.reciprocal %44 {approx = true} : vector<16x1xf32> -> vector<16x1xf32>
    %46 = vector.broadcast %45 : vector<16x1xf32> to vector<16x8xf32>
    %47 = arith.mulf %42, %46 : vector<16x8xf32>
    %48 = vector.extract_strided_slice %28 {offsets = [0, 0], sizes = [32, 16], strides = [1, 1]} : vector<128x16xbf16> to vector<32x16xbf16>
    %49 = arith.truncf %47 : vector<16x8xf32> to vector<16x8xbf16>
    %cst_31 = arith.constant dense<0.000000e+00> : vector<32x8xf32>
    %50 = tpu.matmul %48, %49, %cst_31 {dimension_numbers = #tpu.dot_dimension_numbers<[1], [0], [0], [1], [0, 0, 1, 1], [], []>} : vector<32x16xbf16>, vector<16x8xbf16>, vector<32x8xf32> -> vector<32x8xf32>
    %c0_32 = arith.constant 0 : index
    %c0_33 = arith.constant 0 : index
    %51 = vector.load %arg24[%c0_32, %c0_33] : memref<128x8xf32, #tpu.memory_space<vmem>>, vector<32x8xf32>
    tpu.vector_store %arg24[%c0_32, %c0_33], %50 {strides = array<i32>} : memref<128x8xf32, #tpu.memory_space<vmem>>, vector<32x8xf32>,
    %52 = vector.extract_strided_slice %24 {offsets = [0, 32], sizes = [16, 32], strides = [1, 1]} : vector<16x128xbf16> to vector<16x32xbf16>
    %53 = vector.extract_strided_slice %26 {offsets = [32, 0], sizes = [32, 8], strides = [1, 1]} : vector<128x8xbf16> to vector<32x8xbf16>
    %cst_34 = arith.constant dense<0.000000e+00> : vector<16x8xf32>
    %54 = tpu.matmul %52, %53, %cst_34 {dimension_numbers = #tpu.dot_dimension_numbers<[1], [0], [0], [1], [0, 0, 1, 1], [], []>} : vector<16x32xbf16>, vector<32x8xbf16>, vector<16x8xf32> -> vector<16x8xf32>
    %c1 = arith.constant 1 : index
    %c0_35 = arith.constant 0 : index
    %c0_36 = arith.constant 0 : index
    %55 = vector.load %arg23[%c1, %c0_35, %c0_36] : memref<4x16x8xf32, #tpu.memory_space<vmem>>, vector<1x16x8xf32>
    %56 = vector.shape_cast %55 : vector<1x16x8xf32> to vector<16x8xf32>
    %57 = vector.shape_cast %54 : vector<16x8xf32> to vector<1x16x8xf32>
    tpu.vector_store %arg23[%c1, %c0_35, %c0_36], %57 {strides = array<i32>} : memref<4x16x8xf32, #tpu.memory_space<vmem>>, vector<1x16x8xf32>,
    %58 = arith.maximumf %37, %54 : vector<16x8xf32>
    %cst_37 = arith.constant dense<0xFF800000> : vector<16xf32>
    %59 = vector.multi_reduction <maximumf>, %54, %cst_37 [1] : vector<16x8xf32> to vector<16xf32>
    %60 = vector.shape_cast %59 : vector<16xf32> to vector<16x1xf32>
    %61 = vector.broadcast %60 : vector<16x1xf32> to vector<16x8xf32>
    %62 = arith.subf %54, %61 : vector<16x8xf32>
    %63 = math.exp %62 : vector<16x8xf32>
    %cst_38 = arith.constant dense<0.000000e+00> : vector<16xf32>
    %64 = vector.multi_reduction <add>, %63, %cst_38 [1] : vector<16x8xf32> to vector<16xf32>
    %65 = vector.shape_cast %64 : vector<16xf32> to vector<16x1xf32>
    %66 = tpu.reciprocal %65 {approx = true} : vector<16x1xf32> -> vector<16x1xf32>
    %67 = vector.broadcast %66 : vector<16x1xf32> to vector<16x8xf32>
    %68 = arith.mulf %63, %67 : vector<16x8xf32>
    %69 = vector.extract_strided_slice %28 {offsets = [32, 0], sizes = [32, 16], strides = [1, 1]} : vector<128x16xbf16> to vector<32x16xbf16>
    %70 = arith.truncf %68 : vector<16x8xf32> to vector<16x8xbf16>
    %cst_39 = arith.constant dense<0.000000e+00> : vector<32x8xf32>
    %71 = tpu.matmul %69, %70, %cst_39 {dimension_numbers = #tpu.dot_dimension_numbers<[1], [0], [0], [1], [0, 0, 1, 1], [], []>} : vector<32x16xbf16>, vector<16x8xbf16>, vector<32x8xf32> -> vector<32x8xf32>
    %c32 = arith.constant 32 : index
    %c0_40 = arith.constant 0 : index
    %72 = vector.load %arg24[%c32, %c0_40] : memref<128x8xf32, #tpu.memory_space<vmem>>, vector<32x8xf32>
    tpu.vector_store %arg24[%c32, %c0_40], %71 {strides = array<i32>} : memref<128x8xf32, #tpu.memory_space<vmem>>, vector<32x8xf32>,
    %73 = vector.extract_strided_slice %24 {offsets = [0, 64], sizes = [16, 32], strides = [1, 1]} : vector<16x128xbf16> to vector<16x32xbf16>
    %74 = vector.extract_strided_slice %26 {offsets = [64, 0], sizes = [32, 8], strides = [1, 1]} : vector<128x8xbf16> to vector<32x8xbf16>
    %cst_41 = arith.constant dense<0.000000e+00> : vector<16x8xf32>
    %75 = tpu.matmul %73, %74, %cst_41 {dimension_numbers = #tpu.dot_dimension_numbers<[1], [0], [0], [1], [0, 0, 1, 1], [], []>} : vector<16x32xbf16>, vector<32x8xbf16>, vector<16x8xf32> -> vector<16x8xf32>
    %c2 = arith.constant 2 : index
    %c0_42 = arith.constant 0 : index
    %c0_43 = arith.constant 0 : index
    %76 = vector.load %arg23[%c2, %c0_42, %c0_43] : memref<4x16x8xf32, #tpu.memory_space<vmem>>, vector<1x16x8xf32>
    %77 = vector.shape_cast %76 : vector<1x16x8xf32> to vector<16x8xf32>
    %78 = vector.shape_cast %75 : vector<16x8xf32> to vector<1x16x8xf32>
    tpu.vector_store %arg23[%c2, %c0_42, %c0_43], %78 {strides = array<i32>} : memref<4x16x8xf32, #tpu.memory_space<vmem>>, vector<1x16x8xf32>,
    %79 = arith.maximumf %58, %75 : vector<16x8xf32>
    %cst_44 = arith.constant dense<0xFF800000> : vector<16xf32>
    %80 = vector.multi_reduction <maximumf>, %75, %cst_44 [1] : vector<16x8xf32> to vector<16xf32>
    %81 = vector.shape_cast %80 : vector<16xf32> to vector<16x1xf32>
    %82 = vector.broadcast %81 : vector<16x1xf32> to vector<16x8xf32>
    %83 = arith.subf %75, %82 : vector<16x8xf32>
    %84 = math.exp %83 : vector<16x8xf32>
    %cst_45 = arith.constant dense<0.000000e+00> : vector<16xf32>
    %85 = vector.multi_reduction <add>, %84, %cst_45 [1] : vector<16x8xf32> to vector<16xf32>
    %86 = vector.shape_cast %85 : vector<16xf32> to vector<16x1xf32>
    %87 = tpu.reciprocal %86 {approx = true} : vector<16x1xf32> -> vector<16x1xf32>
    %88 = vector.broadcast %87 : vector<16x1xf32> to vector<16x8xf32>
    %89 = arith.mulf %84, %88 : vector<16x8xf32>
    %90 = vector.extract_strided_slice %28 {offsets = [64, 0], sizes = [32, 16], strides = [1, 1]} : vector<128x16xbf16> to vector<32x16xbf16>
    %91 = arith.truncf %89 : vector<16x8xf32> to vector<16x8xbf16>
    %cst_46 = arith.constant dense<0.000000e+00> : vector<32x8xf32>
    %92 = tpu.matmul %90, %91, %cst_46 {dimension_numbers = #tpu.dot_dimension_numbers<[1], [0], [0], [1], [0, 0, 1, 1], [], []>} : vector<32x16xbf16>, vector<16x8xbf16>, vector<32x8xf32> -> vector<32x8xf32>
    %c64 = arith.constant 64 : index
    %c0_47 = arith.constant 0 : index
    %93 = vector.load %arg24[%c64, %c0_47] : memref<128x8xf32, #tpu.memory_space<vmem>>, vector<32x8xf32>
    tpu.vector_store %arg24[%c64, %c0_47], %92 {strides = array<i32>} : memref<128x8xf32, #tpu.memory_space<vmem>>, vector<32x8xf32>,
    %94 = vector.extract_strided_slice %24 {offsets = [0, 96], sizes = [16, 32], strides = [1, 1]} : vector<16x128xbf16> to vector<16x32xbf16>
    %95 = vector.extract_strided_slice %26 {offsets = [96, 0], sizes = [32, 8], strides = [1, 1]} : vector<128x8xbf16> to vector<32x8xbf16>
    %cst_48 = arith.constant dense<0.000000e+00> : vector<16x8xf32>
    %96 = tpu.matmul %94, %95, %cst_48 {dimension_numbers = #tpu.dot_dimension_numbers<[1], [0], [0], [1], [0, 0, 1, 1], [], []>} : vector<16x32xbf16>, vector<32x8xbf16>, vector<16x8xf32> -> vector<16x8xf32>
    %c3 = arith.constant 3 : index
    %c0_49 = arith.constant 0 : index
    %c0_50 = arith.constant 0 : index
    %97 = vector.load %arg23[%c3, %c0_49, %c0_50] : memref<4x16x8xf32, #tpu.memory_space<vmem>>, vector<1x16x8xf32>
    %98 = vector.shape_cast %97 : vector<1x16x8xf32> to vector<16x8xf32>
    %99 = vector.shape_cast %96 : vector<16x8xf32> to vector<1x16x8xf32>
    tpu.vector_store %arg23[%c3, %c0_49, %c0_50], %99 {strides = array<i32>} : memref<4x16x8xf32, #tpu.memory_space<vmem>>, vector<1x16x8xf32>,
    %100 = arith.maximumf %79, %96 : vector<16x8xf32>
    %cst_51 = arith.constant dense<0xFF800000> : vector<16xf32>
    %101 = vector.multi_reduction <maximumf>, %96, %cst_51 [1] : vector<16x8xf32> to vector<16xf32>
    %102 = vector.shape_cast %101 : vector<16xf32> to vector<16x1xf32>
    %103 = vector.broadcast %102 : vector<16x1xf32> to vector<16x8xf32>
    %104 = arith.subf %96, %103 : vector<16x8xf32>
    %105 = math.exp %104 : vector<16x8xf32>
    %cst_52 = arith.constant dense<0.000000e+00> : vector<16xf32>
    %106 = vector.multi_reduction <add>, %105, %cst_52 [1] : vector<16x8xf32> to vector<16xf32>
    %107 = vector.shape_cast %106 : vector<16xf32> to vector<16x1xf32>
    %108 = tpu.reciprocal %107 {approx = true} : vector<16x1xf32> -> vector<16x1xf32>
    %109 = vector.broadcast %108 : vector<16x1xf32> to vector<16x8xf32>
    %110 = arith.mulf %105, %109 : vector<16x8xf32>
    %111 = vector.extract_strided_slice %28 {offsets = [96, 0], sizes = [32, 16], strides = [1, 1]} : vector<128x16xbf16> to vector<32x16xbf16>
    %112 = arith.truncf %110 : vector<16x8xf32> to vector<16x8xbf16>
    %cst_53 = arith.constant dense<0.000000e+00> : vector<32x8xf32>
    %113 = tpu.matmul %111, %112, %cst_53 {dimension_numbers = #tpu.dot_dimension_numbers<[1], [0], [0], [1], [0, 0, 1, 1], [], []>} : vector<32x16xbf16>, vector<16x8xbf16>, vector<32x8xf32> -> vector<32x8xf32>
    %c96 = arith.constant 96 : index
    %c0_54 = arith.constant 0 : index
    %114 = vector.load %arg24[%c96, %c0_54] : memref<128x8xf32, #tpu.memory_space<vmem>>, vector<32x8xf32>
    tpu.vector_store %arg24[%c96, %c0_54], %113 {strides = array<i32>} : memref<128x8xf32, #tpu.memory_space<vmem>>, vector<32x8xf32>,
    %cst_55 = arith.constant 0.000000e+00 : f32
    %115 = vector.broadcast %cst_55 : f32 to vector<16x8xf32>
    %c0_56 = arith.constant 0 : index
    %c0_57 = arith.constant 0 : index
    %c0_58 = arith.constant 0 : index
    %116 = vector.load %arg23[%c0_56, %c0_57, %c0_58] : memref<4x16x8xf32, #tpu.memory_space<vmem>>, vector<1x16x8xf32>
    %117 = vector.shape_cast %116 : vector<1x16x8xf32> to vector<16x8xf32>
    %118 = arith.subf %117, %100 : vector<16x8xf32>
    %119 = math.exp %118 : vector<16x8xf32>
    %c0_59 = arith.constant 0 : index
    %c0_60 = arith.constant 0 : index
    %c0_61 = arith.constant 0 : index
    %120 = vector.load %arg23[%c0_59, %c0_60, %c0_61] : memref<4x16x8xf32, #tpu.memory_space<vmem>>, vector<1x16x8xf32>
    %121 = vector.shape_cast %120 : vector<1x16x8xf32> to vector<16x8xf32>
    %122 = vector.shape_cast %119 : vector<16x8xf32> to vector<1x16x8xf32>
    tpu.vector_store %arg23[%c0_59, %c0_60, %c0_61], %122 {strides = array<i32>} : memref<4x16x8xf32, #tpu.memory_space<vmem>>, vector<1x16x8xf32>,
    %123 = arith.addf %115, %119 : vector<16x8xf32>
    %c1_62 = arith.constant 1 : index
    %c0_63 = arith.constant 0 : index
    %c0_64 = arith.constant 0 : index
    %124 = vector.load %arg23[%c1_62, %c0_63, %c0_64] : memref<4x16x8xf32, #tpu.memory_space<vmem>>, vector<1x16x8xf32>
    %125 = vector.shape_cast %124 : vector<1x16x8xf32> to vector<16x8xf32>
    %126 = arith.subf %125, %100 : vector<16x8xf32>
    %127 = math.exp %126 : vector<16x8xf32>
    %c1_65 = arith.constant 1 : index
    %c0_66 = arith.constant 0 : index
    %c0_67 = arith.constant 0 : index
    %128 = vector.load %arg23[%c1_65, %c0_66, %c0_67] : memref<4x16x8xf32, #tpu.memory_space<vmem>>, vector<1x16x8xf32>
    %129 = vector.shape_cast %128 : vector<1x16x8xf32> to vector<16x8xf32>
    %130 = vector.shape_cast %127 : vector<16x8xf32> to vector<1x16x8xf32>
    tpu.vector_store %arg23[%c1_65, %c0_66, %c0_67], %130 {strides = array<i32>} : memref<4x16x8xf32, #tpu.memory_space<vmem>>, vector<1x16x8xf32>,
    %131 = arith.addf %123, %127 : vector<16x8xf32>
    %c2_68 = arith.constant 2 : index
    %c0_69 = arith.constant 0 : index
    %c0_70 = arith.constant 0 : index
    %132 = vector.load %arg23[%c2_68, %c0_69, %c0_70] : memref<4x16x8xf32, #tpu.memory_space<vmem>>, vector<1x16x8xf32>
    %133 = vector.shape_cast %132 : vector<1x16x8xf32> to vector<16x8xf32>
    %134 = arith.subf %133, %100 : vector<16x8xf32>
    %135 = math.exp %134 : vector<16x8xf32>
    %c2_71 = arith.constant 2 : index
    %c0_72 = arith.constant 0 : index
    %c0_73 = arith.constant 0 : index
    %136 = vector.load %arg23[%c2_71, %c0_72, %c0_73] : memref<4x16x8xf32, #tpu.memory_space<vmem>>, vector<1x16x8xf32>
    %137 = vector.shape_cast %136 : vector<1x16x8xf32> to vector<16x8xf32>
    %138 = vector.shape_cast %135 : vector<16x8xf32> to vector<1x16x8xf32>
    tpu.vector_store %arg23[%c2_71, %c0_72, %c0_73], %138 {strides = array<i32>} : memref<4x16x8xf32, #tpu.memory_space<vmem>>, vector<1x16x8xf32>,
    %139 = arith.addf %131, %135 : vector<16x8xf32>
    %c3_74 = arith.constant 3 : index
    %c0_75 = arith.constant 0 : index
    %c0_76 = arith.constant 0 : index
    %140 = vector.load %arg23[%c3_74, %c0_75, %c0_76] : memref<4x16x8xf32, #tpu.memory_space<vmem>>, vector<1x16x8xf32>
    %141 = vector.shape_cast %140 : vector<1x16x8xf32> to vector<16x8xf32>
    %142 = arith.subf %141, %100 : vector<16x8xf32>
    %143 = math.exp %142 : vector<16x8xf32>
    %c3_77 = arith.constant 3 : index
    %c0_78 = arith.constant 0 : index
    %c0_79 = arith.constant 0 : index
    %144 = vector.load %arg23[%c3_77, %c0_78, %c0_79] : memref<4x16x8xf32, #tpu.memory_space<vmem>>, vector<1x16x8xf32>
    %145 = vector.shape_cast %144 : vector<1x16x8xf32> to vector<16x8xf32>
    %146 = vector.shape_cast %143 : vector<16x8xf32> to vector<1x16x8xf32>
    tpu.vector_store %arg23[%c3_77, %c0_78, %c0_79], %146 {strides = array<i32>} : memref<4x16x8xf32, #tpu.memory_space<vmem>>, vector<1x16x8xf32>,
    %147 = arith.addf %139, %143 : vector<16x8xf32>
    %148 = tpu.reciprocal %147 {approx = true} : vector<16x8xf32> -> vector<16x8xf32>
    %c0_80 = arith.constant 0 : index
    %c0_81 = arith.constant 0 : index
    %c0_82 = arith.constant 0 : index
    %149 = vector.load %arg23[%c0_80, %c0_81, %c0_82] : memref<4x16x8xf32, #tpu.memory_space<vmem>>, vector<1x16x8xf32>
    %150 = vector.shape_cast %149 : vector<1x16x8xf32> to vector<16x8xf32>
    %151 = arith.mulf %150, %148 : vector<16x8xf32>
    %152 = arith.truncf %151 : vector<16x8xf32> to vector<16x8xbf16>
    %153 = vector.extract_strided_slice %29 {offsets = [0, 0], sizes = [8, 32], strides = [1, 1]} : vector<8x128xbf16> to vector<8x32xbf16>
    %cst_83 = arith.constant dense<0.000000e+00> : vector<16x32xf32>
    %154 = tpu.matmul %152, %153, %cst_83 {dimension_numbers = #tpu.dot_dimension_numbers<[1], [0], [0], [1], [0, 0, 1, 1], [], []>} : vector<16x8xbf16>, vector<8x32xbf16>, vector<16x32xf32> -> vector<16x32xf32>
    %c0_84 = arith.constant 0 : index
    %c0_85 = arith.constant 0 : index
    %155 = vector.load %arg25[%c0_84, %c0_85] : memref<16x128xf32, #tpu.memory_space<vmem>>, vector<16x32xf32>
    tpu.vector_store %arg25[%c0_84, %c0_85], %154 {strides = array<i32>} : memref<16x128xf32, #tpu.memory_space<vmem>>, vector<16x32xf32>,
    %c1_86 = arith.constant 1 : index
    %c0_87 = arith.constant 0 : index
    %c0_88 = arith.constant 0 : index
    %156 = vector.load %arg23[%c1_86, %c0_87, %c0_88] : memref<4x16x8xf32, #tpu.memory_space<vmem>>, vector<1x16x8xf32>
    %157 = vector.shape_cast %156 : vector<1x16x8xf32> to vector<16x8xf32>
    %158 = arith.mulf %157, %148 : vector<16x8xf32>
    %159 = arith.truncf %158 : vector<16x8xf32> to vector<16x8xbf16>
    %160 = vector.extract_strided_slice %29 {offsets = [0, 32], sizes = [8, 32], strides = [1, 1]} : vector<8x128xbf16> to vector<8x32xbf16>
    %cst_89 = arith.constant dense<0.000000e+00> : vector<16x32xf32>
    %161 = tpu.matmul %159, %160, %cst_89 {dimension_numbers = #tpu.dot_dimension_numbers<[1], [0], [0], [1], [0, 0, 1, 1], [], []>} : vector<16x8xbf16>, vector<8x32xbf16>, vector<16x32xf32> -> vector<16x32xf32>
    %c0_90 = arith.constant 0 : index
    %c32_91 = arith.constant 32 : index
    %162 = vector.load %arg25[%c0_90, %c32_91] : memref<16x128xf32, #tpu.memory_space<vmem>>, vector<16x32xf32>
    tpu.vector_store %arg25[%c0_90, %c32_91], %161 {strides = array<i32>} : memref<16x128xf32, #tpu.memory_space<vmem>>, vector<16x32xf32>,
    %c2_92 = arith.constant 2 : index
    %c0_93 = arith.constant 0 : index
    %c0_94 = arith.constant 0 : index
    %163 = vector.load %arg23[%c2_92, %c0_93, %c0_94] : memref<4x16x8xf32, #tpu.memory_space<vmem>>, vector<1x16x8xf32>
    %164 = vector.shape_cast %163 : vector<1x16x8xf32> to vector<16x8xf32>
    %165 = arith.mulf %164, %148 : vector<16x8xf32>
    %166 = arith.truncf %165 : vector<16x8xf32> to vector<16x8xbf16>
    %167 = vector.extract_strided_slice %29 {offsets = [0, 64], sizes = [8, 32], strides = [1, 1]} : vector<8x128xbf16> to vector<8x32xbf16>
    %cst_95 = arith.constant dense<0.000000e+00> : vector<16x32xf32>
    %168 = tpu.matmul %166, %167, %cst_95 {dimension_numbers = #tpu.dot_dimension_numbers<[1], [0], [0], [1], [0, 0, 1, 1], [], []>} : vector<16x8xbf16>, vector<8x32xbf16>, vector<16x32xf32> -> vector<16x32xf32>
    %c0_96 = arith.constant 0 : index
    %c64_97 = arith.constant 64 : index
    %169 = vector.load %arg25[%c0_96, %c64_97] : memref<16x128xf32, #tpu.memory_space<vmem>>, vector<16x32xf32>
    tpu.vector_store %arg25[%c0_96, %c64_97], %168 {strides = array<i32>} : memref<16x128xf32, #tpu.memory_space<vmem>>, vector<16x32xf32>,
    %c3_98 = arith.constant 3 : index
    %c0_99 = arith.constant 0 : index
    %c0_100 = arith.constant 0 : index
    %170 = vector.load %arg23[%c3_98, %c0_99, %c0_100] : memref<4x16x8xf32, #tpu.memory_space<vmem>>, vector<1x16x8xf32>
    %171 = vector.shape_cast %170 : vector<1x16x8xf32> to vector<16x8xf32>
    %172 = arith.mulf %171, %148 : vector<16x8xf32>
    %173 = arith.truncf %172 : vector<16x8xf32> to vector<16x8xbf16>
    %174 = vector.extract_strided_slice %29 {offsets = [0, 96], sizes = [8, 32], strides = [1, 1]} : vector<8x128xbf16> to vector<8x32xbf16>
    %cst_101 = arith.constant dense<0.000000e+00> : vector<16x32xf32>
    %175 = tpu.matmul %173, %174, %cst_101 {dimension_numbers = #tpu.dot_dimension_numbers<[1], [0], [0], [1], [0, 0, 1, 1], [], []>} : vector<16x8xbf16>, vector<8x32xbf16>, vector<16x32xf32> -> vector<16x32xf32>
    %c0_102 = arith.constant 0 : index
    %c96_103 = arith.constant 96 : index
    %176 = vector.load %arg25[%c0_102, %c96_103] : memref<16x128xf32, #tpu.memory_space<vmem>>, vector<16x32xf32>
    tpu.vector_store %arg25[%c0_102, %c96_103], %175 {strides = array<i32>} : memref<16x128xf32, #tpu.memory_space<vmem>>, vector<16x32xf32>,
    %c0_104 = arith.constant 0 : index
    %c0_105 = arith.constant 0 : index
    %177 = vector.load %arg24[%c0_104, %c0_105] : memref<128x8xf32, #tpu.memory_space<vmem>>, vector<128x8xf32>
    %178 = tpu.transpose %177, [1, 0] : vector<128x8xf32> -> vector<8x128xf32>
    %179 = arith.truncf %178 : vector<8x128xf32> to vector<8x128xbf16>
    %c0_106 = arith.constant 0 : index
    %c0_107 = arith.constant 0 : index
    %180 = vector.load %arg11[%c0_106, %c0_107] : memref<128x128xbf16, #tpu.memory_space<vmem>>, vector<128x128xbf16>
    %cst_108 = arith.constant dense<0.000000e+00> : vector<8x128xf32>
    %181 = tpu.matmul %179, %180, %cst_108 {dimension_numbers = #tpu.dot_dimension_numbers<[1], [0], [0], [1], [0, 0, 1, 1], [], []>} : vector<8x128xbf16>, vector<128x128xbf16>, vector<8x128xf32> -> vector<8x128xf32>
    %c0_109 = arith.constant 0 : index
    %c0_110 = arith.constant 0 : index
    %182 = vector.load %arg12[%c0_109, %c0_110] : memref<1x128xf32, #tpu.memory_space<vmem>>, vector<1x128xf32>
    %183 = vector.broadcast %182 : vector<1x128xf32> to vector<8x128xf32>
    %184 = arith.addf %181, %183 : vector<8x128xf32>
    %c0_111 = arith.constant 0 : index
    %c0_112 = arith.constant 0 : index
    %185 = vector.load %arg25[%c0_111, %c0_112] : memref<16x128xf32, #tpu.memory_space<vmem>>, vector<16x128xf32>
    %186 = arith.truncf %185 : vector<16x128xf32> to vector<16x128xbf16>
    %c0_113 = arith.constant 0 : index
    %c0_114 = arith.constant 0 : index
    %187 = vector.load %arg13[%c0_113, %c0_114] : memref<128x128xbf16, #tpu.memory_space<vmem>>, vector<128x128xbf16>
    %cst_115 = arith.constant dense<0.000000e+00> : vector<16x128xf32>
    %188 = tpu.matmul %186, %187, %cst_115 {dimension_numbers = #tpu.dot_dimension_numbers<[1], [0], [0], [1], [0, 0, 1, 1], [], []>} : vector<16x128xbf16>, vector<128x128xbf16>, vector<16x128xf32> -> vector<16x128xf32>
    %c0_116 = arith.constant 0 : index
    %c0_117 = arith.constant 0 : index
    %189 = vector.load %arg14[%c0_116, %c0_117] : memref<1x128xf32, #tpu.memory_space<vmem>>, vector<1x128xf32>
    %190 = vector.broadcast %189 : vector<1x128xf32> to vector<16x128xf32>
    %191 = arith.addf %188, %190 : vector<16x128xf32>
    %c0_118 = arith.constant 0 : index
    %c0_119 = arith.constant 0 : index
    %192 = vector.load %arg15[%c0_118, %c0_119] : memref<128x128xbf16, #tpu.memory_space<vmem>>, vector<128x128xbf16>
    %cst_120 = arith.constant dense<0.000000e+00> : vector<8x128xf32>
    %193 = tpu.matmul %3, %192, %cst_120 {dimension_numbers = #tpu.dot_dimension_numbers<[1], [0], [0], [1], [0, 0, 1, 1], [], []>} : vector<8x128xbf16>, vector<128x128xbf16>, vector<8x128xf32> -> vector<8x128xf32>
    %194 = arith.truncf %184 : vector<8x128xf32> to vector<8x128xbf16>
    %c0_121 = arith.constant 0 : index
    %c0_122 = arith.constant 0 : index
    %195 = vector.load %arg16[%c0_121, %c0_122] : memref<128x128xbf16, #tpu.memory_space<vmem>>, vector<128x128xbf16>
    %cst_123 = arith.constant dense<0.000000e+00> : vector<8x128xf32>
    %196 = tpu.matmul %194, %195, %cst_123 {dimension_numbers = #tpu.dot_dimension_numbers<[1], [0], [0], [1], [0, 0, 1, 1], [], []>} : vector<8x128xbf16>, vector<128x128xbf16>, vector<8x128xf32> -> vector<8x128xf32>
    %197 = arith.addf %193, %196 : vector<8x128xf32>
    %c0_124 = arith.constant 0 : index
    %c0_125 = arith.constant 0 : index
    %198 = vector.load %arg17[%c0_124, %c0_125] : memref<1x128xf32, #tpu.memory_space<vmem>>, vector<1x128xf32>
    %199 = vector.broadcast %198 : vector<1x128xf32> to vector<8x128xf32>
    %200 = arith.addf %197, %199 : vector<8x128xf32>
    %201 = math.tanh %200 : vector<8x128xf32>
    %c0_126 = arith.constant 0 : index
    %c0_127 = arith.constant 0 : index
    %202 = vector.load %arg18[%c0_126, %c0_127] : memref<128x128xbf16, #tpu.memory_space<vmem>>, vector<128x128xbf16>
    %cst_128 = arith.constant dense<0.000000e+00> : vector<16x128xf32>
    %203 = tpu.matmul %1, %202, %cst_128 {dimension_numbers = #tpu.dot_dimension_numbers<[1], [0], [0], [1], [0, 0, 1, 1], [], []>} : vector<16x128xbf16>, vector<128x128xbf16>, vector<16x128xf32> -> vector<16x128xf32>
    %204 = arith.truncf %191 : vector<16x128xf32> to vector<16x128xbf16>
    %c0_129 = arith.constant 0 : index
    %c0_130 = arith.constant 0 : index
    %205 = vector.load %arg19[%c0_129, %c0_130] : memref<128x128xbf16, #tpu.memory_space<vmem>>, vector<128x128xbf16>
    %cst_131 = arith.constant dense<0.000000e+00> : vector<16x128xf32>
    %206 = tpu.matmul %204, %205, %cst_131 {dimension_numbers = #tpu.dot_dimension_numbers<[1], [0], [0], [1], [0, 0, 1, 1], [], []>} : vector<16x128xbf16>, vector<128x128xbf16>, vector<16x128xf32> -> vector<16x128xf32>
    %207 = arith.addf %203, %206 : vector<16x128xf32>
    %c0_132 = arith.constant 0 : index
    %c0_133 = arith.constant 0 : index
    %208 = vector.load %arg20[%c0_132, %c0_133] : memref<1x128xf32, #tpu.memory_space<vmem>>, vector<1x128xf32>
    %209 = vector.broadcast %208 : vector<1x128xf32> to vector<16x128xf32>
    %210 = arith.addf %207, %209 : vector<16x128xf32>
    %211 = math.tanh %210 : vector<16x128xf32>
    %c0_134 = arith.constant 0 : index
    %c0_135 = arith.constant 0 : index
    %c0_136 = arith.constant 0 : index
    %212 = vector.load %arg22[%c0_134, %c0_135, %c0_136] : memref<1x8x128xf32, #tpu.memory_space<vmem>>, vector<1x8x128xf32>
    %213 = vector.shape_cast %212 : vector<1x8x128xf32> to vector<8x128xf32>
    %214 = vector.shape_cast %201 : vector<8x128xf32> to vector<1x8x128xf32>
    tpu.vector_store %arg22[%c0_134, %c0_135, %c0_136], %214 {strides = array<i32>} : memref<1x8x128xf32, #tpu.memory_space<vmem>>, vector<1x8x128xf32>,
    %c0_137 = arith.constant 0 : index
    %c0_138 = arith.constant 0 : index
    %c0_139 = arith.constant 0 : index
    %215 = vector.load %arg21[%c0_137, %c0_138, %c0_139] : memref<1x16x128xf32, #tpu.memory_space<vmem>>, vector<1x16x128xf32>
    %216 = vector.shape_cast %215 : vector<1x16x128xf32> to vector<16x128xf32>
    %217 = vector.shape_cast %211 : vector<16x128xf32> to vector<1x16x128xf32>
    tpu.vector_store %arg21[%c0_137, %c0_138, %c0_139], %217 {strides = array<i32>} : memref<1x16x128xf32, #tpu.memory_space<vmem>>, vector<1x16x128xf32>,
    return
  }
  func.func @transform_0(%arg0: i32) -> (i32, i32, i32) {
    %c0_i32 = arith.constant 0 : i32
    %c0_i32_0 = arith.constant 0 : i32
    %c0_i32_1 = arith.constant 0 : i32
    return %arg0, %c0_i32, %c0_i32_0 : i32, i32, i32
  }
  func.func @transform_1(%arg0: i32) -> (i32, i32, i32) {
    %c0_i32 = arith.constant 0 : i32
    %c0_i32_0 = arith.constant 0 : i32
    %c0_i32_1 = arith.constant 0 : i32
    return %arg0, %c0_i32, %c0_i32_0 : i32, i32, i32
  }
  func.func @transform_2(%arg0: i32) -> (i32, i32) {
    %c0_i32 = arith.constant 0 : i32
    %c0_i32_0 = arith.constant 0 : i32
    %c0_i32_1 = arith.constant 0 : i32
    return %c0_i32, %c0_i32_0 : i32, i32
  }
  func.func @transform_3(%arg0: i32) -> (i32, i32) {
    %c0_i32 = arith.constant 0 : i32
    %c0_i32_0 = arith.constant 0 : i32
    %c0_i32_1 = arith.constant 0 : i32
    return %c0_i32, %c0_i32_0 : i32, i32
  }
  func.func @transform_4(%arg0: i32) -> (i32, i32) {
    %c0_i32 = arith.constant 0 : i32
    %c0_i32_0 = arith.constant 0 : i32
    %c0_i32_1 = arith.constant 0 : i32
    return %c0_i32, %c0_i32_0 : i32, i32
  }
  func.func @transform_5(%arg0: i32) -> (i32, i32) {
    %c0_i32 = arith.constant 0 : i32
    %c0_i32_0 = arith.constant 0 : i32
    %c0_i32_1 = arith.constant 0 : i32
    return %c0_i32, %c0_i32_0 : i32, i32
  }
  func.func @transform_6(%arg0: i32) -> (i32, i32) {
    %c0_i32 = arith.constant 0 : i32
    %c0_i32_0 = arith.constant 0 : i32
    %c0_i32_1 = arith.constant 0 : i32
    return %c0_i32, %c0_i32_0 : i32, i32
  }
  func.func @transform_7(%arg0: i32) -> (i32, i32) {
    %c0_i32 = arith.constant 0 : i32
    %c0_i32_0 = arith.constant 0 : i32
    %c0_i32_1 = arith.constant 0 : i32
    return %c0_i32, %c0_i32_0 : i32, i32
  }
  func.func @transform_8(%arg0: i32) -> (i32, i32) {
    %c0_i32 = arith.constant 0 : i32
    %c0_i32_0 = arith.constant 0 : i32
    %c0_i32_1 = arith.constant 0 : i32
    return %c0_i32, %c0_i32_0 : i32, i32
  }
  func.func @transform_9(%arg0: i32) -> (i32, i32) {
    %c0_i32 = arith.constant 0 : i32
    %c0_i32_0 = arith.constant 0 : i32
    %c0_i32_1 = arith.constant 0 : i32
    return %c0_i32, %c0_i32_0 : i32, i32
  }
  func.func @transform_10(%arg0: i32) -> (i32, i32) {
    %c0_i32 = arith.constant 0 : i32
    %c0_i32_0 = arith.constant 0 : i32
    %c0_i32_1 = arith.constant 0 : i32
    return %c0_i32, %c0_i32_0 : i32, i32
  }
  func.func @transform_11(%arg0: i32) -> (i32, i32) {
    %c0_i32 = arith.constant 0 : i32
    %c0_i32_0 = arith.constant 0 : i32
    %c0_i32_1 = arith.constant 0 : i32
    return %c0_i32, %c0_i32_0 : i32, i32
  }
  func.func @transform_12(%arg0: i32) -> (i32, i32) {
    %c0_i32 = arith.constant 0 : i32
    %c0_i32_0 = arith.constant 0 : i32
    %c0_i32_1 = arith.constant 0 : i32
    return %c0_i32, %c0_i32_0 : i32, i32
  }
  func.func @transform_13(%arg0: i32) -> (i32, i32) {
    %c0_i32 = arith.constant 0 : i32
    %c0_i32_0 = arith.constant 0 : i32
    %c0_i32_1 = arith.constant 0 : i32
    return %c0_i32, %c0_i32_0 : i32, i32
  }
  func.func @transform_14(%arg0: i32) -> (i32, i32) {
    %c0_i32 = arith.constant 0 : i32
    %c0_i32_0 = arith.constant 0 : i32
    %c0_i32_1 = arith.constant 0 : i32
    return %c0_i32, %c0_i32_0 : i32, i32
  }
  func.func @transform_15(%arg0: i32) -> (i32, i32) {
    %c0_i32 = arith.constant 0 : i32
    %c0_i32_0 = arith.constant 0 : i32
    %c0_i32_1 = arith.constant 0 : i32
    return %c0_i32, %c0_i32_0 : i32, i32
  }
  func.func @transform_16(%arg0: i32) -> (i32, i32) {
    %c0_i32 = arith.constant 0 : i32
    %c0_i32_0 = arith.constant 0 : i32
    %c0_i32_1 = arith.constant 0 : i32
    return %c0_i32, %c0_i32_0 : i32, i32
  }
  func.func @transform_17(%arg0: i32) -> (i32, i32) {
    %c0_i32 = arith.constant 0 : i32
    %c0_i32_0 = arith.constant 0 : i32
    %c0_i32_1 = arith.constant 0 : i32
    return %c0_i32, %c0_i32_0 : i32, i32
  }
  func.func @transform_18(%arg0: i32) -> (i32, i32) {
    %c0_i32 = arith.constant 0 : i32
    %c0_i32_0 = arith.constant 0 : i32
    %c0_i32_1 = arith.constant 0 : i32
    return %c0_i32, %c0_i32_0 : i32, i32
  }
  func.func @transform_19(%arg0: i32) -> (i32, i32) {
    %c0_i32 = arith.constant 0 : i32
    %c0_i32_0 = arith.constant 0 : i32
    %c0_i32_1 = arith.constant 0 : i32
    return %c0_i32, %c0_i32_0 : i32, i32
  }
  func.func @transform_20(%arg0: i32) -> (i32, i32, i32) {
    %c0_i32 = arith.constant 0 : i32
    %c0_i32_0 = arith.constant 0 : i32
    %c0_i32_1 = arith.constant 0 : i32
    return %arg0, %c0_i32, %c0_i32_0 : i32, i32, i32
  }
  func.func @transform_21(%arg0: i32) -> (i32, i32, i32) {
    %c0_i32 = arith.constant 0 : i32
    %c0_i32_0 = arith.constant 0 : i32
    %c0_i32_1 = arith.constant 0 : i32
    return %arg0, %c0_i32, %c0_i32_0 : i32, i32, i32
  }
}

</mosaic_0001>

<llo_original>
// kernel: mhco_forward.2
$region0: #{mhco_forward.2}
  #allocation0 [shape = 'u32[]', space=smem, size = 0x4, offset = 0x4, fixed_abs, tag = 'smem constant byte address 0x4 - core index']
  #allocation1 [shape = 'u32[72,128]{1,0:T(1,128)}', space=vmem, size = 0x9000, scoped, tag = 'internal scratch']
  #allocation2 [shape = 'f32[4,16,8]{2,1,0:T(8,128)}', space=vmem, size = 0x8000, scoped, tag = 'scratch operand']
  #allocation3 [shape = 'f32[128,8]{1,0:T(8,128)}', space=vmem, size = 0x10000, scoped, tag = 'scratch operand']
  #allocation4 [shape = 'f32[16,128]{1,0:T(8,128)}', space=vmem, size = 0x2000, scoped, tag = 'scratch operand']
  %s0 = inlined_call_operand.vmem [shape: bf16[128,128], index: 0, kind: input, shape index: {}]
  %s1 = inlined_call_operand.vmem [shape: f32[1,128], index: 1, kind: input, shape index: {}]
  %s2 = inlined_call_operand.vmem [shape: bf16[128,128], index: 2, kind: input, shape index: {}]
  %s3 = inlined_call_operand.vmem [shape: f32[1,128], index: 3, kind: input, shape index: {}]
  %s4 = inlined_call_operand.vmem [shape: bf16[128,128], index: 4, kind: input, shape index: {}]
  %s5 = inlined_call_operand.vmem [shape: f32[1,128], index: 5, kind: input, shape index: {}]
  %s6 = inlined_call_operand.vmem [shape: bf16[128,128], index: 6, kind: input, shape index: {}]
  %s7 = inlined_call_operand.vmem [shape: f32[1,128], index: 7, kind: input, shape index: {}]
  %s8 = inlined_call_operand.vmem [shape: bf16[128,128], index: 8, kind: input, shape index: {}]
  %s9 = inlined_call_operand.vmem [shape: f32[1,128], index: 9, kind: input, shape index: {}]
  %s10 = inlined_call_operand.vmem [shape: bf16[128,128], index: 10, kind: input, shape index: {}]
  %s11 = inlined_call_operand.vmem [shape: f32[1,128], index: 11, kind: input, shape index: {}]
  %s12 = inlined_call_operand.vmem [shape: bf16[128,128], index: 12, kind: input, shape index: {}]
  %s13 = inlined_call_operand.vmem [shape: bf16[128,128], index: 13, kind: input, shape index: {}]
  %s14 = inlined_call_operand.vmem [shape: f32[1,128], index: 14, kind: input, shape index: {}]
  %s15 = inlined_call_operand.vmem [shape: bf16[128,128], index: 15, kind: input, shape index: {}]
  %s16 = inlined_call_operand.vmem [shape: bf16[128,128], index: 16, kind: input, shape index: {}]
  %s17 = inlined_call_operand.vmem [shape: f32[1,128], index: 17, kind: input, shape index: {}]
  %s18 = inlined_call_operand.vmem [shape: f32[16,2,128], index: 18, kind: input, shape index: {}]
  %s19 = inlined_call_operand.vmem [shape: f32[8,2,128], index: 19, kind: input, shape index: {}]
  %s20 = inlined_call_operand.vmem [shape: f32[2,16,128], index: 20, kind: output, shape index: {0}]
  %s21 = inlined_call_operand.vmem [shape: f32[2,8,128], index: 21, kind: output, shape index: {1}]
  %22 = xla_tuple %s20, %s21
  %s23 = sld [smem:[#allocation0]]
  $region121: #{mhco_forward.2} parent=0
    _
  %s25 = ssub.s32 1, %s23
  %s26 = scalar_select 0, %s25, %s23
  loop: start=0, step=1, limit=4
  $region2: #{mhco_forward.2} parent=0 // loop_pre_header
    _
  $region3: #{mhco_forward.2} parent=0 // loop_header
    %s28 = sphi 0, %s32
    %p29 = scmp.ge.s32.totalorder %s28, 4
    %s40 = sphi 0, %s42
    %s43 = sphi 0, %s40
    %s44 = sphi 0, %s43
    %s60 = sphi 0, %s44
    %s68 = sphi 0, %s70
    %s71 = sphi 0, %s68
    %s72 = sphi 0, %s71
    %s88 = sphi 0, %s72
    %s92 = sphi 0, %s92
    %s94 = sphi 0, %s92
    %s95 = sphi 0, %s94
    %s109 = sphi 0, %s95
    %s113 = sphi 0, %s113
    %s115 = sphi 0, %s113
    %s116 = sphi 0, %s115
    %s130 = sphi 0, %s116
    %s134 = sphi 0, %s134
    %s136 = sphi 0, %s134
    %s137 = sphi 0, %s136
    %s151 = sphi 0, %s137
    %s155 = sphi 0, %s155
    %s157 = sphi 0, %s155
    %s158 = sphi 0, %s157
    %s172 = sphi 0, %s158
    %s176 = sphi 0, %s176
    %s178 = sphi 0, %s176
    %s179 = sphi 0, %s178
    %s193 = sphi 0, %s179
    %s197 = sphi 0, %s197
    %s199 = sphi 0, %s197
    %s200 = sphi 0, %s199
    %s214 = sphi 0, %s200
    %s218 = sphi 0, %s218
    %s220 = sphi 0, %s218
    %s221 = sphi 0, %s220
    %s235 = sphi 0, %s221
    %s239 = sphi 0, %s239
    %s241 = sphi 0, %s239
    %s242 = sphi 0, %s241
    %s256 = sphi 0, %s242
    %s260 = sphi 0, %s260
    %s262 = sphi 0, %s260
    %s263 = sphi 0, %s262
    %s277 = sphi 0, %s263
    %s281 = sphi 0, %s281
    %s283 = sphi 0, %s281
    %s284 = sphi 0, %s283
    %s298 = sphi 0, %s284
    %s302 = sphi 0, %s302
    %s304 = sphi 0, %s302
    %s305 = sphi 0, %s304
    %s319 = sphi 0, %s305
    %s323 = sphi 0, %s323
    %s325 = sphi 0, %s323
    %s326 = sphi 0, %s325
    %s340 = sphi 0, %s326
    %s344 = sphi 0, %s344
    %s346 = sphi 0, %s344
    %s347 = sphi 0, %s346
    %s361 = sphi 0, %s347
    %s365 = sphi 0, %s365
    %s367 = sphi 0, %s365
    %s368 = sphi 0, %s367
    %s382 = sphi 0, %s368
    %s386 = sphi 0, %s386
    %s388 = sphi 0, %s386
    %s389 = sphi 0, %s388
    %s403 = sphi 0, %s389
    %s407 = sphi 0, %s407
    %s409 = sphi 0, %s407
    %s410 = sphi 0, %s409
    %s424 = sphi 0, %s410
    %s428 = sphi 0, %s428
    %s430 = sphi 0, %s428
    %s431 = sphi 0, %s430
    %s445 = sphi 0, %s431
    %s449 = sphi 0, %s449
    %s451 = sphi 0, %s449
    %s452 = sphi 0, %s451
    %s466 = sphi 0, %s452
    %s472 = sphi 0, %s474
    %s475 = sphi 0, %s472
    %s476 = sphi 0, %s475
    %s492 = sphi 0, %s476
    %s498 = sphi 0, %s500
    %s501 = sphi 0, %s498
    %s502 = sphi 0, %s501
    %s518 = sphi 0, %s502
  $region4: #{mhco_forward.2} parent=0 // loop_header_branch
    %31 = sbr.rel (%p29) target = $region8
  $region5: #{mhco_forward.2} parent=0 // loop_body
    %s33 = ssub.s32 %s28, 1
    %s34 = ssub.s32 %s28, 2
    %s35 = sadd.s32 %s28, 1
    %s36 = sshrl.u32 %s28, 1
    %s37 = sshrl.u32 %s35, 1
    %s38 = ssub.s32 %s36, %s37
    %p39 = scmp.eq.s32.totalorder %s38, 0
    %s41 = sadd.s32 %s40, 1
    %s42 = scalar_select %p39, %s40, %s41
    %p45 = pneg %p39
    %p46 = scmp.eq.s32.totalorder %s28, 1
    %p47 = por %p45, %p46
    %p48 = scmp.ne.s32.totalorder %s40, %s43
    %p49 = scmp.eq.s32.totalorder %s28, 0
    %p50 = por %p48, %p49
    %p51 = scmp.ne.s32.totalorder %s40, %s43
    %p52 = scmp.eq.s32.totalorder %s33, 1
    %p53 = por %p51, %p52
    %p54 = scmp.ne.s32.totalorder %s43, %s44
    %p55 = scmp.eq.s32.totalorder %s33, 0
    %p56 = por %p54, %p55
    %p57 = scmp.ne.s32.totalorder %s43, %s44
    %p58 = scmp.eq.s32.totalorder %s34, 1
    %p59 = por %p57, %p58
    %p61 = scmp.ne.s32.totalorder %s44, %s60
    %p62 = scmp.eq.s32.totalorder %s34, 0
    %p63 = por %p61, %p62
    %s64 = sshrl.u32 %s28, 1
    %s65 = sshrl.u32 %s35, 1
    %s66 = ssub.s32 %s64, %s65
    %p67 = scmp.eq.s32.totalorder %s66, 0
    %s69 = sadd.s32 %s68, 1
    %s70 = scalar_select %p67, %s68, %s69
    %p73 = pneg %p67
    %p74 = scmp.eq.s32.totalorder %s28, 1
    %p75 = por %p73, %p74
    %p76 = scmp.ne.s32.totalorder %s68, %s71
    %p77 = scmp.eq.s32.totalorder %s28, 0
    %p78 = por %p76, %p77
    %p79 = scmp.ne.s32.totalorder %s68, %s71
    %p80 = scmp.eq.s32.totalorder %s33, 1
    %p81 = por %p79, %p80
    %p82 = scmp.ne.s32.totalorder %s71, %s72
    %p83 = scmp.eq.s32.totalorder %s33, 0
    %p84 = por %p82, %p83
    %p85 = scmp.ne.s32.totalorder %s71, %s72
    %p86 = scmp.eq.s32.totalorder %s34, 1
    %p87 = por %p85, %p86
    %p89 = scmp.ne.s32.totalorder %s72, %s88
    %p90 = scmp.eq.s32.totalorder %s34, 0
    %p91 = por %p89, %p90
    %s93 = sadd.s32 %s92, 1
    %p96 = scmp.eq.s32.totalorder %s28, 1
    %p97 = scmp.ne.s32.totalorder %s92, %s94
    %p98 = scmp.eq.s32.totalorder %s28, 0
    %p99 = por %p97, %p98
    %p100 = scmp.ne.s32.totalorder %s92, %s94
    %p101 = scmp.eq.s32.totalorder %s33, 1
    %p102 = por %p100, %p101
    %p103 = scmp.ne.s32.totalorder %s94, %s95
    %p104 = scmp.eq.s32.totalorder %s33, 0
    %p105 = por %p103, %p104
    %p106 = scmp.ne.s32.totalorder %s94, %s95
    %p107 = scmp.eq.s32.totalorder %s34, 1
    %p108 = por %p106, %p107
    %p110 = scmp.ne.s32.totalorder %s95, %s109
    %p111 = scmp.eq.s32.totalorder %s34, 0
    %p112 = por %p110, %p111
    %s114 = sadd.s32 %s113, 1
    %p117 = scmp.eq.s32.totalorder %s28, 1
    %p118 = scmp.ne.s32.totalorder %s113, %s115
    %p119 = scmp.eq.s32.totalorder %s28, 0
    %p120 = por %p118, %p119
    %p121 = scmp.ne.s32.totalorder %s113, %s115
    %p122 = scmp.eq.s32.totalorder %s33, 1
    %p123 = por %p121, %p122
    %p124 = scmp.ne.s32.totalorder %s115, %s116
    %p125 = scmp.eq.s32.totalorder %s33, 0
    %p126 = por %p124, %p125
    %p127 = scmp.ne.s32.totalorder %s115, %s116
    %p128 = scmp.eq.s32.totalorder %s34, 1
    %p129 = por %p127, %p128
    %p131 = scmp.ne.s32.totalorder %s116, %s130
    %p132 = scmp.eq.s32.totalorder %s34, 0
    %p133 = por %p131, %p132
    %s135 = sadd.s32 %s134, 1
    %p138 = scmp.eq.s32.totalorder %s28, 1
    %p139 = scmp.ne.s32.totalorder %s134, %s136
    %p140 = scmp.eq.s32.totalorder %s28, 0
    %p141 = por %p139, %p140
    %p142 = scmp.ne.s32.totalorder %s134, %s136
    %p143 = scmp.eq.s32.totalorder %s33, 1
    %p144 = por %p142, %p143
    %p145 = scmp.ne.s32.totalorder %s136, %s137
    %p146 = scmp.eq.s32.totalorder %s33, 0
    %p147 = por %p145, %p146
    %p148 = scmp.ne.s32.totalorder %s136, %s137
    %p149 = scmp.eq.s32.totalorder %s34, 1
    %p150 = por %p148, %p149
    %p152 = scmp.ne.s32.totalorder %s137, %s151
    %p153 = scmp.eq.s32.totalorder %s34, 0
    %p154 = por %p152, %p153
    %s156 = sadd.s32 %s155, 1
    %p159 = scmp.eq.s32.totalorder %s28, 1
    %p160 = scmp.ne.s32.totalorder %s155, %s157
    %p161 = scmp.eq.s32.totalorder %s28, 0
    %p162 = por %p160, %p161
    %p163 = scmp.ne.s32.totalorder %s155, %s157
    %p164 = scmp.eq.s32.totalorder %s33, 1
    %p165 = por %p163, %p164
    %p166 = scmp.ne.s32.totalorder %s157, %s158
    %p167 = scmp.eq.s32.totalorder %s33, 0
    %p168 = por %p166, %p167
    %p169 = scmp.ne.s32.totalorder %s157, %s158
    %p170 = scmp.eq.s32.totalorder %s34, 1
    %p171 = por %p169, %p170
    %p173 = scmp.ne.s32.totalorder %s158, %s172
    %p174 = scmp.eq.s32.totalorder %s34, 0
    %p175 = por %p173, %p174
    %s177 = sadd.s32 %s176, 1
    %p180 = scmp.eq.s32.totalorder %s28, 1
    %p181 = scmp.ne.s32.totalorder %s176, %s178
    %p182 = scmp.eq.s32.totalorder %s28, 0
    %p183 = por %p181, %p182
    %p184 = scmp.ne.s32.totalorder %s176, %s178
    %p185 = scmp.eq.s32.totalorder %s33, 1
    %p186 = por %p184, %p185
    %p187 = scmp.ne.s32.totalorder %s178, %s179
    %p188 = scmp.eq.s32.totalorder %s33, 0
    %p189 = por %p187, %p188
    %p190 = scmp.ne.s32.totalorder %s178, %s179
    %p191 = scmp.eq.s32.totalorder %s34, 1
    %p192 = por %p190, %p191
    %p194 = scmp.ne.s32.totalorder %s179, %s193
    %p195 = scmp.eq.s32.totalorder %s34, 0
    %p196 = por %p194, %p195
    %s198 = sadd.s32 %s197, 1
    %p201 = scmp.eq.s32.totalorder %s28, 1
    %p202 = scmp.ne.s32.totalorder %s197, %s199
    %p203 = scmp.eq.s32.totalorder %s28, 0
    %p204 = por %p202, %p203
    %p205 = scmp.ne.s32.totalorder %s197, %s199
    %p206 = scmp.eq.s32.totalorder %s33, 1
    %p207 = por %p205, %p206
    %p208 = scmp.ne.s32.totalorder %s199, %s200
    %p209 = scmp.eq.s32.totalorder %s33, 0
    %p210 = por %p208, %p209
    %p211 = scmp.ne.s32.totalorder %s199, %s200
    %p212 = scmp.eq.s32.totalorder %s34, 1
    %p213 = por %p211, %p212
    %p215 = scmp.ne.s32.totalorder %s200, %s214
    %p216 = scmp.eq.s32.totalorder %s34, 0
    %p217 = por %p215, %p216
    %s219 = sadd.s32 %s218, 1
    %p222 = scmp.eq.s32.totalorder %s28, 1
    %p223 = scmp.ne.s32.totalorder %s218, %s220
    %p224 = scmp.eq.s32.totalorder %s28, 0
    %p225 = por %p223, %p224
    %p226 = scmp.ne.s32.totalorder %s218, %s220
    %p227 = scmp.eq.s32.totalorder %s33, 1
    %p228 = por %p226, %p227
    %p229 = scmp.ne.s32.totalorder %s220, %s221
    %p230 = scmp.eq.s32.totalorder %s33, 0
    %p231 = por %p229, %p230
    %p232 = scmp.ne.s32.totalorder %s220, %s221
    %p233 = scmp.eq.s32.totalorder %s34, 1
    %p234 = por %p232, %p233
    %p236 = scmp.ne.s32.totalorder %s221, %s235
    %p237 = scmp.eq.s32.totalorder %s34, 0
    %p238 = por %p236, %p237
    %s240 = sadd.s32 %s239, 1
    %p243 = scmp.eq.s32.totalorder %s28, 1
    %p244 = scmp.ne.s32.totalorder %s239, %s241
    %p245 = scmp.eq.s32.totalorder %s28, 0
    %p246 = por %p244, %p245
    %p247 = scmp.ne.s32.totalorder %s239, %s241
    %p248 = scmp.eq.s32.totalorder %s33, 1
    %p249 = por %p247, %p248
    %p250 = scmp.ne.s32.totalorder %s241, %s242
    %p251 = scmp.eq.s32.totalorder %s33, 0
    %p252 = por %p250, %p251
    %p253 = scmp.ne.s32.totalorder %s241, %s242
    %p254 = scmp.eq.s32.totalorder %s34, 1
    %p255 = por %p253, %p254
    %p257 = scmp.ne.s32.totalorder %s242, %s256
    %p258 = scmp.eq.s32.totalorder %s34, 0
    %p259 = por %p257, %p258
    %s261 = sadd.s32 %s260, 1
    %p264 = scmp.eq.s32.totalorder %s28, 1
    %p265 = scmp.ne.s32.totalorder %s260, %s262
    %p266 = scmp.eq.s32.totalorder %s28, 0
    %p267 = por %p265, %p266
    %p268 = scmp.ne.s32.totalorder %s260, %s262
    %p269 = scmp.eq.s32.totalorder %s33, 1
    %p270 = por %p268, %p269
    %p271 = scmp.ne.s32.totalorder %s262, %s263
    %p272 = scmp.eq.s32.totalorder %s33, 0
    %p273 = por %p271, %p272
    %p274 = scmp.ne.s32.totalorder %s262, %s263
    %p275 = scmp.eq.s32.totalorder %s34, 1
    %p276 = por %p274, %p275
    %p278 = scmp.ne.s32.totalorder %s263, %s277
    %p279 = scmp.eq.s32.totalorder %s34, 0
    %p280 = por %p278, %p279
    %s282 = sadd.s32 %s281, 1
    %p285 = scmp.eq.s32.totalorder %s28, 1
    %p286 = scmp.ne.s32.totalorder %s281, %s283
    %p287 = scmp.eq.s32.totalorder %s28, 0
    %p288 = por %p286, %p287
    %p289 = scmp.ne.s32.totalorder %s281, %s283
    %p290 = scmp.eq.s32.totalorder %s33, 1
    %p291 = por %p289, %p290
    %p292 = scmp.ne.s32.totalorder %s283, %s284
    %p293 = scmp.eq.s32.totalorder %s33, 0
    %p294 = por %p292, %p293
    %p295 = scmp.ne.s32.totalorder %s283, %s284
    %p296 = scmp.eq.s32.totalorder %s34, 1
    %p297 = por %p295, %p296
    %p299 = scmp.ne.s32.totalorder %s284, %s298
    %p300 = scmp.eq.s32.totalorder %s34, 0
    %p301 = por %p299, %p300
    %s303 = sadd.s32 %s302, 1
    %p306 = scmp.eq.s32.totalorder %s28, 1
    %p307 = scmp.ne.s32.totalorder %s302, %s304
    %p308 = scmp.eq.s32.totalorder %s28, 0
    %p309 = por %p307, %p308
    %p310 = scmp.ne.s32.totalorder %s302, %s304
    %p311 = scmp.eq.s32.totalorder %s33, 1
    %p312 = por %p310, %p311
    %p313 = scmp.ne.s32.totalorder %s304, %s305
    %p314 = scmp.eq.s32.totalorder %s33, 0
    %p315 = por %p313, %p314
    %p316 = scmp.ne.s32.totalorder %s304, %s305
    %p317 = scmp.eq.s32.totalorder %s34, 1
    %p318 = por %p316, %p317
    %p320 = scmp.ne.s32.totalorder %s305, %s319
    %p321 = scmp.eq.s32.totalorder %s34, 0
    %p322 = por %p320, %p321
    %s324 = sadd.s32 %s323, 1
    %p327 = scmp.eq.s32.totalorder %s28, 1
    %p328 = scmp.ne.s32.totalorder %s323, %s325
    %p329 = scmp.eq.s32.totalorder %s28, 0
    %p330 = por %p328, %p329
    %p331 = scmp.ne.s32.totalorder %s323, %s325
    %p332 = scmp.eq.s32.totalorder %s33, 1
    %p333 = por %p331, %p332
    %p334 = scmp.ne.s32.totalorder %s325, %s326
    %p335 = scmp.eq.s32.totalorder %s33, 0
    %p336 = por %p334, %p335
    %p337 = scmp.ne.s32.totalorder %s325, %s326
    %p338 = scmp.eq.s32.totalorder %s34, 1
    %p339 = por %p337, %p338
    %p341 = scmp.ne.s32.totalorder %s326, %s340
    %p342 = scmp.eq.s32.totalorder %s34, 0
    %p343 = por %p341, %p342
    %s345 = sadd.s32 %s344, 1
    %p348 = scmp.eq.s32.totalorder %s28, 1
    %p349 = scmp.ne.s32.totalorder %s344, %s346
    %p350 = scmp.eq.s32.totalorder %s28, 0
    %p351 = por %p349, %p350
    %p352 = scmp.ne.s32.totalorder %s344, %s346
    %p353 = scmp.eq.s32.totalorder %s33, 1
    %p354 = por %p352, %p353
    %p355 = scmp.ne.s32.totalorder %s346, %s347
    %p356 = scmp.eq.s32.totalorder %s33, 0
    %p357 = por %p355, %p356
    %p358 = scmp.ne.s32.totalorder %s346, %s347
    %p359 = scmp.eq.s32.totalorder %s34, 1
    %p360 = por %p358, %p359
    %p362 = scmp.ne.s32.totalorder %s347, %s361
    %p363 = scmp.eq.s32.totalorder %s34, 0
    %p364 = por %p362, %p363
    %s366 = sadd.s32 %s365, 1
    %p369 = scmp.eq.s32.totalorder %s28, 1
    %p370 = scmp.ne.s32.totalorder %s365, %s367
    %p371 = scmp.eq.s32.totalorder %s28, 0
    %p372 = por %p370, %p371
    %p373 = scmp.ne.s32.totalorder %s365, %s367
    %p374 = scmp.eq.s32.totalorder %s33, 1
    %p375 = por %p373, %p374
    %p376 = scmp.ne.s32.totalorder %s367, %s368
    %p377 = scmp.eq.s32.totalorder %s33, 0
    %p378 = por %p376, %p377
    %p379 = scmp.ne.s32.totalorder %s367, %s368
    %p380 = scmp.eq.s32.totalorder %s34, 1
    %p381 = por %p379, %p380
    %p383 = scmp.ne.s32.totalorder %s368, %s382
    %p384 = scmp.eq.s32.totalorder %s34, 0
    %p385 = por %p383, %p384
    %s387 = sadd.s32 %s386, 1
    %p390 = scmp.eq.s32.totalorder %s28, 1
    %p391 = scmp.ne.s32.totalorder %s386, %s388
    %p392 = scmp.eq.s32.totalorder %s28, 0
    %p393 = por %p391, %p392
    %p394 = scmp.ne.s32.totalorder %s386, %s388
    %p395 = scmp.eq.s32.totalorder %s33, 1
    %p396 = por %p394, %p395
    %p397 = scmp.ne.s32.totalorder %s388, %s389
    %p398 = scmp.eq.s32.totalorder %s33, 0
    %p399 = por %p397, %p398
    %p400 = scmp.ne.s32.totalorder %s388, %s389
    %p401 = scmp.eq.s32.totalorder %s34, 1
    %p402 = por %p400, %p401
    %p404 = scmp.ne.s32.totalorder %s389, %s403
    %p405 = scmp.eq.s32.totalorder %s34, 0
    %p406 = por %p404, %p405
    %s408 = sadd.s32 %s407, 1
    %p411 = scmp.eq.s32.totalorder %s28, 1
    %p412 = scmp.ne.s32.totalorder %s407, %s409
    %p413 = scmp.eq.s32.totalorder %s28, 0
    %p414 = por %p412, %p413
    %p415 = scmp.ne.s32.totalorder %s407, %s409
    %p416 = scmp.eq.s32.totalorder %s33, 1
    %p417 = por %p415, %p416
    %p418 = scmp.ne.s32.totalorder %s409, %s410
    %p419 = scmp.eq.s32.totalorder %s33, 0
    %p420 = por %p418, %p419
    %p421 = scmp.ne.s32.totalorder %s409, %s410
    %p422 = scmp.eq.s32.totalorder %s34, 1
    %p423 = por %p421, %p422
    %p425 = scmp.ne.s32.totalorder %s410, %s424
    %p426 = scmp.eq.s32.totalorder %s34, 0
    %p427 = por %p425, %p426
    %s429 = sadd.s32 %s428, 1
    %p432 = scmp.eq.s32.totalorder %s28, 1
    %p433 = scmp.ne.s32.totalorder %s428, %s430
    %p434 = scmp.eq.s32.totalorder %s28, 0
    %p435 = por %p433, %p434
    %p436 = scmp.ne.s32.totalorder %s428, %s430
    %p437 = scmp.eq.s32.totalorder %s33, 1
    %p438 = por %p436, %p437
    %p439 = scmp.ne.s32.totalorder %s430, %s431
    %p440 = scmp.eq.s32.totalorder %s33, 0
    %p441 = por %p439, %p440
    %p442 = scmp.ne.s32.totalorder %s430, %s431
    %p443 = scmp.eq.s32.totalorder %s34, 1
    %p444 = por %p442, %p443
    %p446 = scmp.ne.s32.totalorder %s431, %s445
    %p447 = scmp.eq.s32.totalorder %s34, 0
    %p448 = por %p446, %p447
    %s450 = sadd.s32 %s449, 1
    %p453 = scmp.eq.s32.totalorder %s28, 1
    %p454 = scmp.ne.s32.totalorder %s449, %s451
    %p455 = scmp.eq.s32.totalorder %s28, 0
    %p456 = por %p454, %p455
    %p457 = scmp.ne.s32.totalorder %s449, %s451
    %p458 = scmp.eq.s32.totalorder %s33, 1
    %p459 = por %p457, %p458
    %p460 = scmp.ne.s32.totalorder %s451, %s452
    %p461 = scmp.eq.s32.totalorder %s33, 0
    %p462 = por %p460, %p461
    %p463 = scmp.ne.s32.totalorder %s451, %s452
    %p464 = scmp.eq.s32.totalorder %s34, 1
    %p465 = por %p463, %p464
    %p467 = scmp.ne.s32.totalorder %s452, %s466
    %p468 = scmp.eq.s32.totalorder %s34, 0
    %p469 = por %p467, %p468
    %s470 = ssub.s32 %s28, %s35
    %p471 = scmp.eq.s32.totalorder %s470, 0
    %s473 = sadd.s32 %s472, 1
    %s474 = scalar_select %p471, %s472, %s473
    %p477 = pneg %p471
    %p478 = scmp.eq.s32.totalorder %s28, 1
    %p479 = por %p477, %p478
    %p480 = scmp.ne.s32.totalorder %s472, %s475
    %p481 = scmp.eq.s32.totalorder %s28, 0
    %p482 = por %p480, %p481
    %p483 = scmp.ne.s32.totalorder %s472, %s475
    %p484 = scmp.eq.s32.totalorder %s33, 1
    %p485 = por %p483, %p484
    %p486 = scmp.ne.s32.totalorder %s475, %s476
    %p487 = scmp.eq.s32.totalorder %s33, 0
    %p488 = por %p486, %p487
    %p489 = scmp.ne.s32.totalorder %s475, %s476
    %p490 = scmp.eq.s32.totalorder %s34, 1
    %p491 = por %p489, %p490
    %p493 = scmp.ne.s32.totalorder %s476, %s492
    %p494 = scmp.eq.s32.totalorder %s34, 0
    %p495 = por %p493, %p494
    %s496 = ssub.s32 %s28, %s35
    %p497 = scmp.eq.s32.totalorder %s496, 0
    %s499 = sadd.s32 %s498, 1
    %s500 = scalar_select %p497, %s498, %s499
    %p503 = pneg %p497
    %p504 = scmp.eq.s32.totalorder %s28, 1
    %p505 = por %p503, %p504
    %p506 = scmp.ne.s32.totalorder %s498, %s501
    %p507 = scmp.eq.s32.totalorder %s28, 0
    %p508 = por %p506, %p507
    %p509 = scmp.ne.s32.totalorder %s498, %s501
    %p510 = scmp.eq.s32.totalorder %s33, 1
    %p511 = por %p509, %p510
    %p512 = scmp.ne.s32.totalorder %s501, %s502
    %p513 = scmp.eq.s32.totalorder %s33, 0
    %p514 = por %p512, %p513
    %p515 = scmp.ne.s32.totalorder %s501, %s502
    %p516 = scmp.eq.s32.totalorder %s34, 1
    %p517 = por %p515, %p516
    %p519 = scmp.ne.s32.totalorder %s502, %s518
    %p520 = scmp.eq.s32.totalorder %s34, 0
    %p521 = por %p519, %p520
    %p522 = scmp.le.s32.totalorder 1, %s28
    %p523 = scmp.lt.s32.totalorder %s28, 3
    %p524 = pnand %p522, %p523
    %p525 = pneg %p524
    // Predicated region
    $region9: #{mhco_forward.2} parent=5 // pred_check
      _
    $region10: #{mhco_forward.2} parent=5 // pred_check_branch
      %527 = sbr.rel (%p524) target = $region12
    $region11: #{mhco_forward.2} parent=5 // pred_region
      %s528 = ssub.s32 %s28, 1
      // Predicated region
      $region13: #{mhco_forward.2} parent=11 // pred_check
        %p529 = pneg %p105
      $region14: #{mhco_forward.2} parent=11 // pred_check_branch
        %531 = sbr.rel (%p529) target = $region16
      $region15: #{mhco_forward.2} parent=11 // pred_region
        _
      $region16: #{mhco_forward.2} parent=11 // pred_fallthru
        _
      // Predicated region
      $region17: #{mhco_forward.2} parent=11 // pred_check
        %p532 = pneg %p126
      $region18: #{mhco_forward.2} parent=11 // pred_check_branch
        %534 = sbr.rel (%p532) target = $region20
      $region19: #{mhco_forward.2} parent=11 // pred_region
        _
      $region20: #{mhco_forward.2} parent=11 // pred_fallthru
        _
      // Predicated region
      $region21: #{mhco_forward.2} parent=11 // pred_check
        %p535 = pneg %p147
      $region22: #{mhco_forward.2} parent=11 // pred_check_branch
        %537 = sbr.rel (%p535) target = $region24
      $region23: #{mhco_forward.2} parent=11 // pred_region
        _
      $region24: #{mhco_forward.2} parent=11 // pred_fallthru
        _
      // Predicated region
      $region25: #{mhco_forward.2} parent=11 // pred_check
        %p538 = pneg %p168
      $region26: #{mhco_forward.2} parent=11 // pred_check_branch
        %540 = sbr.rel (%p538) target = $region28
      $region27: #{mhco_forward.2} parent=11 // pred_region
        _
      $region28: #{mhco_forward.2} parent=11 // pred_fallthru
        _
      // Predicated region
      $region29: #{mhco_forward.2} parent=11 // pred_check
        %p541 = pneg %p189
      $region30: #{mhco_forward.2} parent=11 // pred_check_branch
        %543 = sbr.rel (%p541) target = $region32
      $region31: #{mhco_forward.2} parent=11 // pred_region
        _
      $region32: #{mhco_forward.2} parent=11 // pred_fallthru
        _
      // Predicated region
      $region33: #{mhco_forward.2} parent=11 // pred_check
        %p544 = pneg %p210
      $region34: #{mhco_forward.2} parent=11 // pred_check_branch
        %546 = sbr.rel (%p544) target = $region36
      $region35: #{mhco_forward.2} parent=11 // pred_region
        _
      $region36: #{mhco_forward.2} parent=11 // pred_fallthru
        _
      // Predicated region
      $region37: #{mhco_forward.2} parent=11 // pred_check
        %p547 = pneg %p231
      $region38: #{mhco_forward.2} parent=11 // pred_check_branch
        %549 = sbr.rel (%p547) target = $region40
      $region39: #{mhco_forward.2} parent=11 // pred_region
        _
      $region40: #{mhco_forward.2} parent=11 // pred_fallthru
        _
      // Predicated region
      $region41: #{mhco_forward.2} parent=11 // pred_check
        %p550 = pneg %p252
      $region42: #{mhco_forward.2} parent=11 // pred_check_branch
        %552 = sbr.rel (%p550) target = $region44
      $region43: #{mhco_forward.2} parent=11 // pred_region
        _
      $region44: #{mhco_forward.2} parent=11 // pred_fallthru
        _
      // Predicated region
      $region45: #{mhco_forward.2} parent=11 // pred_check
        %p553 = pneg %p273
      $region46: #{mhco_forward.2} parent=11 // pred_check_branch
        %555 = sbr.rel (%p553) target = $region48
      $region47: #{mhco_forward.2} parent=11 // pred_region
        _
      $region48: #{mhco_forward.2} parent=11 // pred_fallthru
        _
      // Predicated region
      $region49: #{mhco_forward.2} parent=11 // pred_check
        %p556 = pneg %p294
      $region50: #{mhco_forward.2} parent=11 // pred_check_branch
        %558 = sbr.rel (%p556) target = $region52
      $region51: #{mhco_forward.2} parent=11 // pred_region
        _
      $region52: #{mhco_forward.2} parent=11 // pred_fallthru
        _
      // Predicated region
      $region53: #{mhco_forward.2} parent=11 // pred_check
        %p559 = pneg %p315
      $region54: #{mhco_forward.2} parent=11 // pred_check_branch
        %561 = sbr.rel (%p559) target = $region56
      $region55: #{mhco_forward.2} parent=11 // pred_region
        _
      $region56: #{mhco_forward.2} parent=11 // pred_fallthru
        _
      // Predicated region
      $region57: #{mhco_forward.2} parent=11 // pred_check
        %p562 = pneg %p336
      $region58: #{mhco_forward.2} parent=11 // pred_check_branch
        %564 = sbr.rel (%p562) target = $region60
      $region59: #{mhco_forward.2} parent=11 // pred_region
        _
      $region60: #{mhco_forward.2} parent=11 // pred_fallthru
        _
      // Predicated region
      $region61: #{mhco_forward.2} parent=11 // pred_check
        %p565 = pneg %p357
      $region62: #{mhco_forward.2} parent=11 // pred_check_branch
        %567 = sbr.rel (%p565) target = $region64
      $region63: #{mhco_forward.2} parent=11 // pred_region
        _
      $region64: #{mhco_forward.2} parent=11 // pred_fallthru
        _
      // Predicated region
      $region65: #{mhco_forward.2} parent=11 // pred_check
        %p568 = pneg %p378
      $region66: #{mhco_forward.2} parent=11 // pred_check_branch
        %570 = sbr.rel (%p568) target = $region68
      $region67: #{mhco_forward.2} parent=11 // pred_region
        _
      $region68: #{mhco_forward.2} parent=11 // pred_fallthru
        _
      // Predicated region
      $region69: #{mhco_forward.2} parent=11 // pred_check
        %p571 = pneg %p399
      $region70: #{mhco_forward.2} parent=11 // pred_check_branch
        %573 = sbr.rel (%p571) target = $region72
      $region71: #{mhco_forward.2} parent=11 // pred_region
        _
      $region72: #{mhco_forward.2} parent=11 // pred_fallthru
        _
      // Predicated region
      $region73: #{mhco_forward.2} parent=11 // pred_check
        %p574 = pneg %p420
      $region74: #{mhco_forward.2} parent=11 // pred_check_branch
        %576 = sbr.rel (%p574) target = $region76
      $region75: #{mhco_forward.2} parent=11 // pred_region
        _
      $region76: #{mhco_forward.2} parent=11 // pred_fallthru
        _
      // Predicated region
      $region77: #{mhco_forward.2} parent=11 // pred_check
        %p577 = pneg %p441
      $region78: #{mhco_forward.2} parent=11 // pred_check_branch
        %579 = sbr.rel (%p577) target = $region80
      $region79: #{mhco_forward.2} parent=11 // pred_region
        _
      $region80: #{mhco_forward.2} parent=11 // pred_fallthru
        _
      // Predicated region
      $region81: #{mhco_forward.2} parent=11 // pred_check
        %p580 = pneg %p462
      $region82: #{mhco_forward.2} parent=11 // pred_check_branch
        %582 = sbr.rel (%p580) target = $region84
      $region83: #{mhco_forward.2} parent=11 // pred_region
        _
      $region84: #{mhco_forward.2} parent=11 // pred_fallthru
        _
    $region12: #{mhco_forward.2} parent=5 // pred_fallthru
      _
    %p583 = scmp.lt.s32.totalorder %s28, 2
    // Predicated region
    $region85: #{mhco_forward.2} parent=5 // pred_check
      %p584 = pneg %p583
    $region86: #{mhco_forward.2} parent=5 // pred_check_branch
      %586 = sbr.rel (%p584) target = $region88
    $region87: #{mhco_forward.2} parent=5 // pred_region
      // Predicated region
      $region89: #{mhco_forward.2} parent=87 // pred_check
        %p587 = pneg %p50
      $region90: #{mhco_forward.2} parent=87 // pred_check_branch
        %589 = sbr.rel (%p587) target = $region92
      $region91: #{mhco_forward.2} parent=87 // pred_region
        %s590 = sshrl.u32 %s28, 1
        %s591 = ssub.s32 1, %s590
        %s592 = smul.u32 32, %s591
        %p593 = scmp.lt.s32.totalorder %s590, 0
        %s594 = scalar_select %p593, %s590, 0
        %s595 = smul.addr %s594, 2
        %s596 = scalar_lea.vmem %s18, %s595
        %s597 = sshrl.u32 %s28, 1
        %s598 = ssub.s32 1, %s597
        %s599 = smul.u32 32, %s598
      $region92: #{mhco_forward.2} parent=87 // pred_fallthru
        _
      // Predicated region
      $region93: #{mhco_forward.2} parent=87 // pred_check
        %p600 = pneg %p78
      $region94: #{mhco_forward.2} parent=87 // pred_check_branch
        %602 = sbr.rel (%p600) target = $region96
      $region95: #{mhco_forward.2} parent=87 // pred_region
        %s603 = sshrl.u32 %s28, 1
        %s604 = ssub.s32 1, %s603
        %s605 = smul.u32 16, %s604
        %p606 = scmp.lt.s32.totalorder %s603, 0
        %s607 = scalar_select %p606, %s603, 0
        %s608 = smul.addr %s607, 2
        %s609 = scalar_lea.vmem %s19, %s608
        %s610 = sshrl.u32 %s28, 1
        %s611 = ssub.s32 1, %s610
        %s612 = smul.u32 16, %s611
      $region96: #{mhco_forward.2} parent=87 // pred_fallthru
        _
    $region88: #{mhco_forward.2} parent=5 // pred_fallthru
      _
    %p613 = scmp.le.s32.totalorder 1, %s28
    %p614 = scmp.lt.s32.totalorder %s28, 3
    %p615 = pnand %p613, %p614
    %p616 = pneg %p615
    // Predicated region
    $region97: #{mhco_forward.2} parent=5 // pred_check
      _
    $region98: #{mhco_forward.2} parent=5 // pred_check_branch
      %618 = sbr.rel (%p615) target = $region100
    $region99: #{mhco_forward.2} parent=5 // pred_region
      #allocation5 [shape = 'u8[4096]{0}', space=vmem, size = 0x1000, dematerialized = true, scoped, tag = 'FusionAdapter Buffer %fusion.2 = bf16[2,16,128]{2,1,0:T(8,128)(2,1)} fusion(%param_18.2), kind=kLoop, calls=%fused_computation.11.clone.clone, metadata={op_name="jit(mhco_forward)/convert_element_type" stack_frame_id=36}']
      #allocation6 [shape = 'u8[2048]{0}', space=vmem, size = 0x800, dematerialized = true, scoped, tag = 'FusionAdapter Buffer %fusion.4 = bf16[2,8,128]{2,1,0:T(8,128)(2,1)} fusion(%param_19.2), kind=kLoop, calls=%fused_computation.14.clone.clone, metadata={op_name="jit(mhco_forward)/convert_element_type" stack_frame_id=37}']
      %s619 = ssub.s32 %s28, 1
      %s620 = sshrl.u32 %s33, 1
      %s621 = ssub.s32 1, %s620
      %s622 = smul.u32 32, %s621
      %p623 = scmp.lt.s32.totalorder %s620, 0
      %s624 = scalar_select %p623, %s620, 0
      %s625 = smul.addr %s624, 2
      %s626 = scalar_lea.vmem %s18, %s625
      %p627 = pneg %p56
      %p628 = pneg %p53
      %s629 = sshrl.u32 %s33, 1
      %s630 = ssub.s32 1, %s629
      %s631 = smul.u32 16, %s630
      %p632 = scmp.lt.s32.totalorder %s629, 0
      %s633 = scalar_select %p632, %s629, 0
      %s634 = smul.addr %s633, 2
      %s635 = scalar_lea.vmem %s19, %s634
      %p636 = pneg %p84
      %p637 = pneg %p81
      %p638 = pneg %p105
      %p639 = pneg %p102
      %p640 = pneg %p126
      %p641 = pneg %p123
      %p642 = pneg %p147
      %p643 = pneg %p144
      %p644 = pneg %p168
      %p645 = pneg %p165
      %p646 = pneg %p189
      %p647 = pneg %p186
      %p648 = pneg %p210
      %p649 = pneg %p207
      %p650 = pneg %p231
      %p651 = pneg %p228
      %p652 = pneg %p252
      %p653 = pneg %p249
      %p654 = pneg %p273
      %p655 = pneg %p270
      %p656 = pneg %p294
      %p657 = pneg %p291
      %p658 = pneg %p315
      %p659 = pneg %p312
      %p660 = pneg %p336
      %p661 = pneg %p333
      %p662 = pneg %p357
      %p663 = pneg %p354
      %p664 = pneg %p378
      %p665 = pneg %p375
      %p666 = pneg %p399
      %p667 = pneg %p396
      %p668 = pneg %p420
      %p669 = pneg %p417
      %p670 = pneg %p441
      %p671 = pneg %p438
      %p672 = pneg %p462
      %p673 = pneg %p459
      %p674 = pneg %p488
      %p675 = pneg %p485
      %p676 = scmp.lt.s32.totalorder %s33, 1
      %s677 = scalar_select %p676, %s33, 1
      %s678 = smul.addr %s677, 2
      %s679 = smul.addr %s678, 8
      %s680 = scalar_lea.vmem %s20, %s679
      %p681 = pneg %p514
      %p682 = pneg %p511
      %p683 = scmp.lt.s32.totalorder %s33, 1
      %s684 = scalar_select %p683, %s33, 1
      %s685 = smul.addr %s684, 8
      %s686 = scalar_lea.vmem %s21, %s685
      %s687 = sshrl.u32 %s33, 1
      %s688 = ssub.s32 1, %s687
      %s689 = smul.u32 32, %s688
      %p690 = scmp.lt.s32.totalorder %s687, 0
      %s691 = scalar_select %p690, %s687, 0
      %s692 = smul.addr %s691, 2
      %s693 = scalar_lea.vmem %s18, %s692
      %s694 = sshrl.u32 %s33, 1
      %s695 = ssub.s32 1, %s694
      %s696 = smul.u32 32, %s695
      %s697 = sshrl.u32 %s33, 1
      %s698 = ssub.s32 1, %s697
      %s699 = smul.u32 16, %s698
      %p700 = scmp.lt.s32.totalorder %s697, 0
      %s701 = scalar_select %p700, %s697, 0
      %s702 = smul.addr %s701, 2
      %s703 = scalar_lea.vmem %s19, %s702
      %s704 = sshrl.u32 %s33, 1
      %s705 = ssub.s32 1, %s704
      %s706 = smul.u32 16, %s705
      %p707 = scmp.lt.s32.totalorder %s33, 1
      %s708 = scalar_select %p707, %s33, 1
      %s709 = smul.addr %s708, 2
      %s710 = smul.addr %s709, 8
      %s711 = scalar_lea.vmem %s20, %s710
      %p712 = scmp.lt.s32.totalorder %s33, 1
      %s713 = scalar_select %p712, %s33, 1
      %s714 = smul.addr %s713, 8
      %s715 = scalar_lea.vmem %s21, %s714
      %s716 = sshrl.u32 %s33, 1
      %s717 = sand.u32 %s33, 1
      %s718 = smul.addr %s716, 2
      %s719 = scalar_lea.vmem %s18, %s718
      %s720 = scalar_lea.vmem %s719, %s717
      %s721 = ssub.s32 1, %s33
      %s722 = sor.u32 %s33, %s721
      %p723 = scmp.lt.s32.totalorder %s722, 0
      %s724 = scalar_select %p723, 0, 255
      %s726 = ssub.s32 256, 1
      %s727 = sand.u32 %s724, %s726
      %v728 = vld [vmem:[%s720] ss:$2 sm:%s727]
      %v729 = vpack.c.bf16 0.0, %v728
      %s731 = ssub.s32 16, 1
      %732 = vst [vmem:[#allocation5] sm:%s731] %v729
      %s733 = scalar_lea.vmem %s18, 16
      %s734 = sshrl.u32 %s33, 1
      %s735 = sand.u32 %s33, 1
      %s736 = smul.addr %s734, 2
      %s737 = scalar_lea.vmem %s733, %s736
      %s738 = scalar_lea.vmem %s737, %s735
      %s739 = ssub.s32 1, %s33
      %s740 = sor.u32 %s33, %s739
      %p741 = scmp.lt.s32.totalorder %s740, 0
      %s742 = scalar_select %p741, 0, 255
      %s744 = ssub.s32 256, 1
      %s745 = sand.u32 %s742, %s744
      %v746 = vld [vmem:[%s738] ss:$2 sm:%s745]
      %s747 = scalar_lea.vmem [#allocation5], 4
      %v748 = vpack.c.bf16 0.0, %v746
      %s750 = ssub.s32 16, 1
      %751 = vst [vmem:[%s747] sm:%s750] %v748
      %s752 = sshrl.u32 %s33, 1
      %s753 = sand.u32 %s33, 1
      %s754 = smul.addr %s752, 2
      %s755 = scalar_lea.vmem %s19, %s754
      %s756 = scalar_lea.vmem %s755, %s753
      %s757 = ssub.s32 1, %s33
      %s758 = sor.u32 %s33, %s757
      %p759 = scmp.lt.s32.totalorder %s758, 0
      %s760 = scalar_select %p759, 0, 255
      %s762 = ssub.s32 256, 1
      %s763 = sand.u32 %s760, %s762
      %v764 = vld [vmem:[%s756] ss:$2 sm:%s763]
      %v765 = vpack.c.bf16 0.0, %v764
      %s767 = ssub.s32 16, 1
      %768 = vst [vmem:[#allocation6] sm:%s767] %v765
      %v770 = vld [vmem:[#allocation5] sm:$0xf]
      %v771 = vld [vmem:[#allocation5 + $0x4] sm:$0xf]
      %v772 = vld [vmem:[#allocation6] sm:$0xf]
      %v773 = vld [vmem:[%s0] sm:$0xf]
      %v774 = vld [vmem:[%s0 + $0x4] sm:$0xf]
      %v775 = vld [vmem:[%s0 + $0x8] sm:$0xf]
      %v776 = vld [vmem:[%s0 + $0xc] sm:$0xf]
      %v777 = vld [vmem:[%s0 + $0x10] sm:$0xf]
      %v778 = vld [vmem:[%s0 + $0x14] sm:$0xf]
      %v779 = vld [vmem:[%s0 + $0x18] sm:$0xf]
      %v780 = vld [vmem:[%s0 + $0x1c] sm:$0xf]
      %v781 = vld [vmem:[%s0 + $0x20] sm:$0xf]
      %v782 = vld [vmem:[%s0 + $0x24] sm:$0xf]
      %v783 = vld [vmem:[%s0 + $0x28] sm:$0xf]
      %v784 = vld [vmem:[%s0 + $0x2c] sm:$0xf]
      %v785 = vld [vmem:[%s0 + $0x30] sm:$0xf]
      %v786 = vld [vmem:[%s0 + $0x34] sm:$0xf]
      %v787 = vld [vmem:[%s0 + $0x38] sm:$0xf]
      %v788 = vld [vmem:[%s0 + $0x3c] sm:$0xf]
      %v789 = vld [vmem:[%s1] sm:$0x1]
      %v791 = vperm.slane %v789, 0
      %v795 = vunpack.c.l.b16 %v770
      %v796 = vunpack.c.l.b16 %v771
      %v797 = vpack.c.b16 %v796, %v795
      %v815 = vunpack.c.l.b16 %v773
      %v816 = vunpack.c.l.b16 %v774
      %v817 = vunpack.c.l.b16 %v775
      %v818 = vunpack.c.l.b16 %v776
      %v819 = vunpack.c.l.b16 %v777
      %v820 = vunpack.c.l.b16 %v778
      %v821 = vunpack.c.l.b16 %v779
      %v822 = vunpack.c.l.b16 %v780
      %v823 = vunpack.c.l.b16 %v781
      %v824 = vunpack.c.l.b16 %v782
      %v825 = vunpack.c.l.b16 %v783
      %v826 = vunpack.c.l.b16 %v784
      %v827 = vunpack.c.l.b16 %v785
      %v828 = vunpack.c.l.b16 %v786
      %v829 = vunpack.c.l.b16 %v787
      %v830 = vunpack.c.l.b16 %v788
      %v831 = vpack.c.b16 %v816, %v815
      %v832 = vpack.c.b16 %v818, %v817
      %v833 = vpack.c.b16 %v820, %v819
      %v834 = vpack.c.b16 %v822, %v821
      %v835 = vpack.c.b16 %v824, %v823
      %v836 = vpack.c.b16 %v826, %v825
      %v837 = vpack.c.b16 %v828, %v827
      %v838 = vpack.c.b16 %v830, %v829
      %847 = vmatpush.bf16.msra.mxu0 %v838
      %848 = vmatpush.bf16.msra.mxu0 %v837
      %849 = vmatpush.bf16.msra.mxu0 %v836
      %850 = vmatpush.bf16.msra.mxu0 %v835
      %851 = vmatpush.bf16.msra.mxu0 %v834
      %852 = vmatpush.bf16.msra.mxu0 %v833
      %853 = vmatpush.bf16.msra.mxu0 %v832
      %854 = vmatpush.bf16.msra.mxu0 %v831
      %855 = vmatmul.bf16.gmra.mxu0 %v797
      %v856 = vpop.f32.mrf.mxu0
      %v857 = vadd.f32 %v791, %v856
      %v858 = vpop.f32.mrf.mxu0
      %v859 = vadd.f32 %v791, %v858
      %860 = vdwg.mxu0
      %v861 = vld [vmem:[%s2] sm:$0xf]
      %v862 = vld [vmem:[%s2 + $0x4] sm:$0xf]
      %v863 = vld [vmem:[%s2 + $0x8] sm:$0xf]
      %v864 = vld [vmem:[%s2 + $0xc] sm:$0xf]
      %v865 = vld [vmem:[%s2 + $0x10] sm:$0xf]
      %v866 = vld [vmem:[%s2 + $0x14] sm:$0xf]
      %v867 = vld [vmem:[%s2 + $0x18] sm:$0xf]
      %v868 = vld [vmem:[%s2 + $0x1c] sm:$0xf]
      %v869 = vld [vmem:[%s2 + $0x20] sm:$0xf]
      %v870 = vld [vmem:[%s2 + $0x24] sm:$0xf]
      %v871 = vld [vmem:[%s2 + $0x28] sm:$0xf]
      %v872 = vld [vmem:[%s2 + $0x2c] sm:$0xf]
      %v873 = vld [vmem:[%s2 + $0x30] sm:$0xf]
      %v874 = vld [vmem:[%s2 + $0x34] sm:$0xf]
      %v875 = vld [vmem:[%s2 + $0x38] sm:$0xf]
      %v876 = vld [vmem:[%s2 + $0x3c] sm:$0xf]
      %v877 = vld [vmem:[%s3] sm:$0x1]
      %v879 = vperm.slane %v877, 0
      %v897 = vunpack.c.l.b16 %v861
      %v898 = vunpack.c.l.b16 %v862
      %v899 = vunpack.c.l.b16 %v863
      %v900 = vunpack.c.l.b16 %v864
      %v901 = vunpack.c.l.b16 %v865
      %v902 = vunpack.c.l.b16 %v866
      %v903 = vunpack.c.l.b16 %v867
      %v904 = vunpack.c.l.b16 %v868
      %v905 = vunpack.c.l.b16 %v869
      %v906 = vunpack.c.l.b16 %v870
      %v907 = vunpack.c.l.b16 %v871
      %v908 = vunpack.c.l.b16 %v872
      %v909 = vunpack.c.l.b16 %v873
      %v910 = vunpack.c.l.b16 %v874
      %v911 = vunpack.c.l.b16 %v875
      %v912 = vunpack.c.l.b16 %v876
      %v913 = vpack.c.b16 %v898, %v897
      %v914 = vpack.c.b16 %v900, %v899
      %v915 = vpack.c.b16 %v902, %v901
      %v916 = vpack.c.b16 %v904, %v903
      %v917 = vpack.c.b16 %v906, %v905
      %v918 = vpack.c.b16 %v908, %v907
      %v919 = vpack.c.b16 %v910, %v909
      %v920 = vpack.c.b16 %v912, %v911
      %929 = vmatpush.bf16.msra.mxu0 %v920
      %930 = vmatpush.bf16.msra.mxu0 %v919
      %931 = vmatpush.bf16.msra.mxu0 %v918
      %932 = vmatpush.bf16.msra.mxu0 %v917
      %933 = vmatpush.bf16.msra.mxu0 %v916
      %934 = vmatpush.bf16.msra.mxu0 %v915
      %935 = vmatpush.bf16.msra.mxu0 %v914
      %936 = vmatpush.bf16.msra.mxu0 %v913
      %937 = vmatmul.bf16.gmra.mxu0 %v797
      %v938 = vpop.f32.mrf.mxu0
      %v939 = vadd.f32 %v879, %v938
      %v940 = vpop.f32.mrf.mxu0
      %v941 = vadd.f32 %v879, %v940
      %942 = vdwg.mxu0
      %v943 = vld [vmem:[%s4] sm:$0xf]
      %v944 = vld [vmem:[%s4 + $0x4] sm:$0xf]
      %v945 = vld [vmem:[%s4 + $0x8] sm:$0xf]
      %v946 = vld [vmem:[%s4 + $0xc] sm:$0xf]
      %v947 = vld [vmem:[%s4 + $0x10] sm:$0xf]
      %v948 = vld [vmem:[%s4 + $0x14] sm:$0xf]
      %v949 = vld [vmem:[%s4 + $0x18] sm:$0xf]
      %v950 = vld [vmem:[%s4 + $0x1c] sm:$0xf]
      %v951 = vld [vmem:[%s4 + $0x20] sm:$0xf]
      %v952 = vld [vmem:[%s4 + $0x24] sm:$0xf]
      %v953 = vld [vmem:[%s4 + $0x28] sm:$0xf]
      %v954 = vld [vmem:[%s4 + $0x2c] sm:$0xf]
      %v955 = vld [vmem:[%s4 + $0x30] sm:$0xf]
      %v956 = vld [vmem:[%s4 + $0x34] sm:$0xf]
      %v957 = vld [vmem:[%s4 + $0x38] sm:$0xf]
      %v958 = vld [vmem:[%s4 + $0x3c] sm:$0xf]
      %v959 = vld [vmem:[%s5] sm:$0x1]
      %v961 = vperm.slane %v959, 0
      %v979 = vunpack.c.l.b16 %v943
      %v980 = vunpack.c.l.b16 %v944
      %v981 = vunpack.c.l.b16 %v945
      %v982 = vunpack.c.l.b16 %v946
      %v983 = vunpack.c.l.b16 %v947
      %v984 = vunpack.c.l.b16 %v948
      %v985 = vunpack.c.l.b16 %v949
      %v986 = vunpack.c.l.b16 %v950
      %v987 = vunpack.c.l.b16 %v951
      %v988 = vunpack.c.l.b16 %v952
      %v989 = vunpack.c.l.b16 %v953
      %v990 = vunpack.c.l.b16 %v954
      %v991 = vunpack.c.l.b16 %v955
      %v992 = vunpack.c.l.b16 %v956
      %v993 = vunpack.c.l.b16 %v957
      %v994 = vunpack.c.l.b16 %v958
      %v995 = vpack.c.b16 %v980, %v979
      %v996 = vpack.c.b16 %v982, %v981
      %v997 = vpack.c.b16 %v984, %v983
      %v998 = vpack.c.b16 %v986, %v985
      %v999 = vpack.c.b16 %v988, %v987
      %v1000 = vpack.c.b16 %v990, %v989
      %v1001 = vpack.c.b16 %v992, %v991
      %v1002 = vpack.c.b16 %v994, %v993
      %1011 = vmatpush.bf16.msra.mxu0 %v1002
      %1012 = vmatpush.bf16.msra.mxu0 %v1001
      %1013 = vmatpush.bf16.msra.mxu0 %v1000
      %1014 = vmatpush.bf16.msra.mxu0 %v999
      %1015 = vmatpush.bf16.msra.mxu0 %v998
      %1016 = vmatpush.bf16.msra.mxu0 %v997
      %1017 = vmatpush.bf16.msra.mxu0 %v996
      %1018 = vmatpush.bf16.msra.mxu0 %v995
      %1019 = vmatmul.bf16.gmra.mxu0 %v772
      %v1020 = vpop.f32.mrf.mxu0
      %v1021 = vadd.f32 %v961, %v1020
      %v1022 = vpop.f32.mrf.mxu0
      %1023 = vdwg.mxu0
      %v1024 = vld [vmem:[%s6] sm:$0xf]
      %v1025 = vld [vmem:[%s6 + $0x4] sm:$0xf]
      %v1026 = vld [vmem:[%s6 + $0x8] sm:$0xf]
      %v1027 = vld [vmem:[%s6 + $0xc] sm:$0xf]
      %v1028 = vld [vmem:[%s6 + $0x10] sm:$0xf]
      %v1029 = vld [vmem:[%s6 + $0x14] sm:$0xf]
      %v1030 = vld [vmem:[%s6 + $0x18] sm:$0xf]
      %v1031 = vld [vmem:[%s6 + $0x1c] sm:$0xf]
      %v1032 = vld [vmem:[%s6 + $0x20] sm:$0xf]
      %v1033 = vld [vmem:[%s6 + $0x24] sm:$0xf]
      %v1034 = vld [vmem:[%s6 + $0x28] sm:$0xf]
      %v1035 = vld [vmem:[%s6 + $0x2c] sm:$0xf]
      %v1036 = vld [vmem:[%s6 + $0x30] sm:$0xf]
      %v1037 = vld [vmem:[%s6 + $0x34] sm:$0xf]
      %v1038 = vld [vmem:[%s6 + $0x38] sm:$0xf]
      %v1039 = vld [vmem:[%s6 + $0x3c] sm:$0xf]
      %v1040 = vld [vmem:[%s7] sm:$0x1]
      %v1042 = vperm.slane %v1040, 0
      %v1060 = vunpack.c.l.b16 %v1024
      %v1061 = vunpack.c.l.b16 %v1025
      %v1062 = vunpack.c.l.b16 %v1026
      %v1063 = vunpack.c.l.b16 %v1027
      %v1064 = vunpack.c.l.b16 %v1028
      %v1065 = vunpack.c.l.b16 %v1029
      %v1066 = vunpack.c.l.b16 %v1030
      %v1067 = vunpack.c.l.b16 %v1031
      %v1068 = vunpack.c.l.b16 %v1032
      %v1069 = vunpack.c.l.b16 %v1033
      %v1070 = vunpack.c.l.b16 %v1034
      %v1071 = vunpack.c.l.b16 %v1035
      %v1072 = vunpack.c.l.b16 %v1036
      %v1073 = vunpack.c.l.b16 %v1037
      %v1074 = vunpack.c.l.b16 %v1038
      %v1075 = vunpack.c.l.b16 %v1039
      %v1076 = vpack.c.b16 %v1061, %v1060
      %v1077 = vpack.c.b16 %v1063, %v1062
      %v1078 = vpack.c.b16 %v1065, %v1064
      %v1079 = vpack.c.b16 %v1067, %v1066
      %v1080 = vpack.c.b16 %v1069, %v1068
      %v1081 = vpack.c.b16 %v1071, %v1070
      %v1082 = vpack.c.b16 %v1073, %v1072
      %v1083 = vpack.c.b16 %v1075, %v1074
      %1092 = vmatpush.bf16.msra.mxu0 %v1083
      %1093 = vmatpush.bf16.msra.mxu0 %v1082
      %1094 = vmatpush.bf16.msra.mxu0 %v1081
      %1095 = vmatpush.bf16.msra.mxu0 %v1080
      %1096 = vmatpush.bf16.msra.mxu0 %v1079
      %1097 = vmatpush.bf16.msra.mxu0 %v1078
      %1098 = vmatpush.bf16.msra.mxu0 %v1077
      %1099 = vmatpush.bf16.msra.mxu0 %v1076
      %1100 = vmatmul.bf16.gmra.mxu0 %v772
      %v1101 = vpop.f32.mrf.mxu0
      %v1102 = vadd.f32 %v1042, %v1101
      %v1103 = vpop.f32.mrf.mxu0
      %1104 = vdwg.mxu0
      %v1105 = vpack.c.bf16 %v857, %v857
      %v1106 = vpack.c.bf16 %v859, %v859
      %1107 = vxpose.xlu0.b32.start [1/16] %v1021, 128
      %1108 = vxpose.xlu0.b32.cont [2/16] 0.0, 128
      %1109 = vxpose.xlu0.b32.cont [3/16] 0.0, 128
      %1110 = vxpose.xlu0.b32.cont [4/16] 0.0, 128
      %1111 = vxpose.xlu0.b32.cont [5/16] 0.0, 128
      %1112 = vxpose.xlu0.b32.cont [6/16] 0.0, 128
      %1113 = vxpose.xlu0.b32.cont [7/16] 0.0, 128
      %1114 = vxpose.xlu0.b32.cont [8/16] 0.0, 128
      %1115 = vxpose.xlu0.b32.cont [9/16] 0.0, 128
      %1116 = vxpose.xlu0.b32.cont [10/16] 0.0, 128
      %1117 = vxpose.xlu0.b32.cont [11/16] 0.0, 128
      %1118 = vxpose.xlu0.b32.cont [12/16] 0.0, 128
      %1119 = vxpose.xlu0.b32.cont [13/16] 0.0, 128
      %1120 = vxpose.xlu0.b32.cont [14/16] 0.0, 128
      %1121 = vxpose.xlu0.b32.cont [15/16] 0.0, 128
      %1122 = vxpose.xlu0.b32.end [16/16] 0.0, 128
      %v1123 = vpop.trf.xlu0
      %v1124 = vpop.trf.xlu0
      %v1125 = vpop.trf.xlu0
      %v1126 = vpop.trf.xlu0
      %v1127 = vpop.trf.xlu0
      %v1128 = vpop.trf.xlu0
      %v1129 = vpop.trf.xlu0
      %v1130 = vpop.trf.xlu0
      %v1131 = vpop.trf.xlu0
      %v1132 = vpop.trf.xlu0
      %v1133 = vpop.trf.xlu0
      %v1134 = vpop.trf.xlu0
      %v1135 = vpop.trf.xlu0
      %v1136 = vpop.trf.xlu0
      %v1137 = vpop.trf.xlu0
      %v1138 = vpop.trf.xlu0
      %v1139 = vpack.c.bf16 %v1123, %v1123
      %v1140 = vpack.c.bf16 %v1124, %v1124
      %v1141 = vpack.c.bf16 %v1125, %v1125
      %v1142 = vpack.c.bf16 %v1126, %v1126
      %v1143 = vpack.c.bf16 %v1127, %v1127
      %v1144 = vpack.c.bf16 %v1128, %v1128
      %v1145 = vpack.c.bf16 %v1129, %v1129
      %v1146 = vpack.c.bf16 %v1130, %v1130
      %v1147 = vpack.c.bf16 %v1131, %v1131
      %v1148 = vpack.c.bf16 %v1132, %v1132
      %v1149 = vpack.c.bf16 %v1133, %v1133
      %v1150 = vpack.c.bf16 %v1134, %v1134
      %v1151 = vpack.c.bf16 %v1135, %v1135
      %v1152 = vpack.c.bf16 %v1136, %v1136
      %v1153 = vpack.c.bf16 %v1137, %v1137
      %v1154 = vpack.c.bf16 %v1138, %v1138
      %1155 = vxpose.xlu0.b32.start [1/16] %v939, 128
      %1156 = vxpose.xlu0.b32.cont [2/16] %v941, 128
      %1157 = vxpose.xlu0.b32.cont [3/16] 0.0, 128
      %1158 = vxpose.xlu0.b32.cont [4/16] 0.0, 128
      %1159 = vxpose.xlu0.b32.cont [5/16] 0.0, 128
      %1160 = vxpose.xlu0.b32.cont [6/16] 0.0, 128
      %1161 = vxpose.xlu0.b32.cont [7/16] 0.0, 128
      %1162 = vxpose.xlu0.b32.cont [8/16] 0.0, 128
      %1163 = vxpose.xlu0.b32.cont [9/16] 0.0, 128
      %1164 = vxpose.xlu0.b32.cont [10/16] 0.0, 128
      %1165 = vxpose.xlu0.b32.cont [11/16] 0.0, 128
      %1166 = vxpose.xlu0.b32.cont [12/16] 0.0, 128
      %1167 = vxpose.xlu0.b32.cont [13/16] 0.0, 128
      %1168 = vxpose.xlu0.b32.cont [14/16] 0.0, 128
      %1169 = vxpose.xlu0.b32.cont [15/16] 0.0, 128
      %1170 = vxpose.xlu0.b32.end [16/16] 0.0, 128
      %v1171 = vpop.trf.xlu0
      %v1172 = vpop.trf.xlu0
      %v1173 = vpop.trf.xlu0
      %v1174 = vpop.trf.xlu0
      %v1175 = vpop.trf.xlu0
      %v1176 = vpop.trf.xlu0
      %v1177 = vpop.trf.xlu0
      %v1178 = vpop.trf.xlu0
      %v1179 = vpop.trf.xlu0
      %v1180 = vpop.trf.xlu0
      %v1181 = vpop.trf.xlu0
      %v1182 = vpop.trf.xlu0
      %v1183 = vpop.trf.xlu0
      %v1184 = vpop.trf.xlu0
      %v1185 = vpop.trf.xlu0
      %v1186 = vpop.trf.xlu0
      %v1187 = vpack.c.bf16 %v1171, %v1171
      %v1188 = vpack.c.bf16 %v1172, %v1172
      %v1189 = vpack.c.bf16 %v1173, %v1173
      %v1190 = vpack.c.bf16 %v1174, %v1174
      %v1191 = vpack.c.bf16 %v1175, %v1175
      %v1192 = vpack.c.bf16 %v1176, %v1176
      %v1193 = vpack.c.bf16 %v1177, %v1177
      %v1194 = vpack.c.bf16 %v1178, %v1178
      %v1195 = vpack.c.bf16 %v1179, %v1179
      %v1196 = vpack.c.bf16 %v1180, %v1180
      %v1197 = vpack.c.bf16 %v1181, %v1181
      %v1198 = vpack.c.bf16 %v1182, %v1182
      %v1199 = vpack.c.bf16 %v1183, %v1183
      %v1200 = vpack.c.bf16 %v1184, %v1184
      %v1201 = vpack.c.bf16 %v1185, %v1185
      %v1202 = vpack.c.bf16 %v1186, %v1186
      %v1203 = vpack.c.bf16 %v1102, %v1102
      %v1206 = vunpack.c.l.b16 %v1105
      %v1207 = vunpack.c.l.b16 %v1106
      %v1208 = vpack.c.b16 %v1207, %v1206
      %v1213 = vunpack.c.l.b16 %v1139
      %v1214 = vunpack.c.l.b16 %v1140
      %v1215 = vunpack.c.l.b16 %v1141
      %v1216 = vunpack.c.l.b16 %v1142
      %v1217 = vpack.c.b16 %v1214, %v1213
      %v1218 = vpack.c.b16 %v1216, %v1215
      %vm1221 = vcmask 261120
      %v1223 = vsel %vm1221, %v1208, 0
      %1225 = vmatpush.bf16.msra.mxu0 0
      %1226 = vmatpush.bf16.msra.mxu0 0
      %1227 = vmatpush.bf16.msra.mxu0 0
      %1228 = vmatpush.bf16.msra.mxu0 0
      %1229 = vmatpush.bf16.msra.mxu0 0
      %1230 = vmatpush.bf16.msra.mxu0 0
      %1231 = vmatpush.bf16.msra.mxu0 %v1218
      %1232 = vmatpush.bf16.msra.mxu0 %v1217
      %1233 = vmatmul.bf16.gmra.mxu0 %v1223
      %v1234 = vpop.f32.mrf.mxu0
      %v1235 = vadd.f32 0.0, %v1234
      %v1236 = vpop.f32.mrf.mxu0
      %v1237 = vadd.f32 0.0, %v1236
      %1238 = vdwg.mxu0
      %vm1239 = vcmask 64512
      %1240 = vst.msk [vmem:[#allocation2] sm:$0xff] %vm1239, %v1235
      %1241 = vst.msk [vmem:[#allocation2 + $0x8] sm:$0xff] %vm1239, %v1237
      %v1242 = vsel %vm1239, %v1235, -inf
      %1243 = vmax.xlane.f32.xlu0 %v1242
      %v1244 = vpop.xlane.xlu0 %1243
      %v1245 = vsel %vm1239, %v1237, -inf
      %1246 = vmax.xlane.f32.xlu0 %v1245
      %v1247 = vpop.xlane.xlu0 %1246
      %v1248 = vsub.f32 %v1235, %v1244
      %v1249 = vsub.f32 %v1237, %v1247
      %v1250 = vmul.f32 %v1248, 1.442695
      %v1251 = vpow.pop %v1250
      %v1252 = vmul.f32 %v1249, 1.442695
      %v1253 = vpow.pop %v1252
      %v1254 = vsel %vm1239, %v1251, 0.0
      %1255 = vadd.xlane.f32.xlu0 %v1254
      %v1256 = vpop.xlane.xlu0 %1255
      %v1257 = vsel %vm1239, %v1253, 0.0
      %1258 = vadd.xlane.f32.xlu0 %v1257
      %v1259 = vpop.xlane.xlu0 %1258
      %v1260 = vrcp.pop %v1256
      %v1261 = vrcp.pop %v1259
      %v1262 = vmul.f32 %v1251, %v1260
      %v1263 = vmul.f32 %v1253, %v1261
      %v1264 = vpack.c.bf16 %v1263, %v1262
      %v1269 = vunpack.c.l.b16 %v1187
      %v1270 = vunpack.c.l.b16 %v1188
      %v1271 = vunpack.c.l.b16 %v1189
      %v1272 = vunpack.c.l.b16 %v1190
      %v1273 = vpack.c.b16 %v1270, %v1269
      %v1274 = vpack.c.b16 %v1272, %v1271
      %vm1275 = vcmask 130048
      %v1277 = vsel %vm1275, %v1273, 0
      %v1280 = vsel %vm1275, %v1274, 0
      %1282 = vmatpush.bf16.msra.mxu0 0
      %1283 = vmatpush.bf16.msra.mxu0 0
      %1284 = vmatpush.bf16.msra.mxu0 0
      %1285 = vmatpush.bf16.msra.mxu0 0
      %1286 = vmatpush.bf16.msra.mxu0 0
      %1287 = vmatpush.bf16.msra.mxu0 0
      %1288 = vmatpush.bf16.msra.mxu0 0
      %1289 = vmatpush.bf16.msra.mxu0 %v1264
      %1290 = vmatmul.bf16.gmra.mxu0 %v1277
      %v1291 = vpop.f32.mrf.mxu0
      %v1292 = vadd.f32 0.0, %v1291
      %v1293 = vpop.f32.mrf.mxu0
      %v1294 = vadd.f32 0.0, %v1293
      %1295 = vmatmul.bf16.gmra.mxu0 %v1280
      %v1296 = vpop.f32.mrf.mxu0
      %v1297 = vadd.f32 0.0, %v1296
      %v1298 = vpop.f32.mrf.mxu0
      %v1299 = vadd.f32 0.0, %v1298
      %1300 = vdwg.mxu0
      %1301 = vst.msk [vmem:[#allocation3] sm:$0xff] %vm1239, %v1292
      %1302 = vst.msk [vmem:[#allocation3 + $0x8] sm:$0xff] %vm1239, %v1294
      %1303 = vst.msk [vmem:[#allocation3 + $0x10] sm:$0xff] %vm1239, %v1297
      %1304 = vst.msk [vmem:[#allocation3 + $0x18] sm:$0xff] %vm1239, %v1299
      %1305 = vrot.lane.b32.xlu0 %v1208, 96
      %v1306 = vpop.permute.xlu0 %1305
      %v1311 = vunpack.c.l.b16 %v1143
      %v1312 = vunpack.c.l.b16 %v1144
      %v1313 = vunpack.c.l.b16 %v1145
      %v1314 = vunpack.c.l.b16 %v1146
      %v1315 = vpack.c.b16 %v1312, %v1311
      %v1316 = vpack.c.b16 %v1314, %v1313
      %v1320 = vsel %vm1221, %v1306, 0
      %1322 = vmatpush.bf16.msra.mxu0 0
      %1323 = vmatpush.bf16.msra.mxu0 0
      %1324 = vmatpush.bf16.msra.mxu0 0
      %1325 = vmatpush.bf16.msra.mxu0 0
      %1326 = vmatpush.bf16.msra.mxu0 0
      %1327 = vmatpush.bf16.msra.mxu0 0
      %1328 = vmatpush.bf16.msra.mxu0 %v1316
      %1329 = vmatpush.bf16.msra.mxu0 %v1315
      %1330 = vmatmul.bf16.gmra.mxu0 %v1320
      %v1331 = vpop.f32.mrf.mxu0
      %v1332 = vadd.f32 0.0, %v1331
      %v1333 = vpop.f32.mrf.mxu0
      %v1334 = vadd.f32 0.0, %v1333
      %1335 = vdwg.mxu0
      %s1336 = scalar_lea.vmem [#allocation2], 16
      %1337 = vst.msk [vmem:[%s1336] sm:$0xff] %vm1239, %v1332
      %1338 = vst.msk [vmem:[%s1336 + $0x8] sm:$0xff] %vm1239, %v1334
      %v1339 = vmax.f32 %v1235, %v1332
      %v1340 = vmax.f32 %v1237, %v1334
      %v1341 = vsel %vm1239, %v1332, -inf
      %1342 = vmax.xlane.f32.xlu0 %v1341
      %v1343 = vpop.xlane.xlu0 %1342
      %v1344 = vsel %vm1239, %v1334, -inf
      %1345 = vmax.xlane.f32.xlu0 %v1344
      %v1346 = vpop.xlane.xlu0 %1345
      %v1347 = vsub.f32 %v1332, %v1343
      %v1348 = vsub.f32 %v1334, %v1346
      %v1349 = vmul.f32 %v1347, 1.442695
      %v1350 = vpow.pop %v1349
      %v1351 = vmul.f32 %v1348, 1.442695
      %v1352 = vpow.pop %v1351
      %v1353 = vsel %vm1239, %v1350, 0.0
      %1354 = vadd.xlane.f32.xlu0 %v1353
      %v1355 = vpop.xlane.xlu0 %1354
      %v1356 = vsel %vm1239, %v1352, 0.0
      %1357 = vadd.xlane.f32.xlu0 %v1356
      %v1358 = vpop.xlane.xlu0 %1357
      %v1359 = vrcp.pop %v1355
      %v1360 = vrcp.pop %v1358
      %v1361 = vmul.f32 %v1350, %v1359
      %v1362 = vmul.f32 %v1352, %v1360
      %v1363 = vpack.c.bf16 %v1362, %v1361
      %v1368 = vunpack.c.l.b16 %v1191
      %v1369 = vunpack.c.l.b16 %v1192
      %v1370 = vunpack.c.l.b16 %v1193
      %v1371 = vunpack.c.l.b16 %v1194
      %v1372 = vpack.c.b16 %v1369, %v1368
      %v1373 = vpack.c.b16 %v1371, %v1370
      %v1375 = vsel %vm1275, %v1372, 0
      %v1378 = vsel %vm1275, %v1373, 0
      %1380 = vmatpush.bf16.msra.mxu0 0
      %1381 = vmatpush.bf16.msra.mxu0 0
      %1382 = vmatpush.bf16.msra.mxu0 0
      %1383 = vmatpush.bf16.msra.mxu0 0
      %1384 = vmatpush.bf16.msra.mxu0 0
      %1385 = vmatpush.bf16.msra.mxu0 0
      %1386 = vmatpush.bf16.msra.mxu0 0
      %1387 = vmatpush.bf16.msra.mxu0 %v1363
      %1388 = vmatmul.bf16.gmra.mxu0 %v1375
      %v1389 = vpop.f32.mrf.mxu0
      %v1390 = vadd.f32 0.0, %v1389
      %v1391 = vpop.f32.mrf.mxu0
      %v1392 = vadd.f32 0.0, %v1391
      %1393 = vmatmul.bf16.gmra.mxu0 %v1378
      %v1394 = vpop.f32.mrf.mxu0
      %v1395 = vadd.f32 0.0, %v1394
      %v1396 = vpop.f32.mrf.mxu0
      %v1397 = vadd.f32 0.0, %v1396
      %1398 = vdwg.mxu0
      %1399 = vst.msk [vmem:[#allocation3 + $0x20] sm:$0xff] %vm1239, %v1390
      %1400 = vst.msk [vmem:[#allocation3 + $0x28] sm:$0xff] %vm1239, %v1392
      %1401 = vst.msk [vmem:[#allocation3 + $0x30] sm:$0xff] %vm1239, %v1395
      %1402 = vst.msk [vmem:[#allocation3 + $0x38] sm:$0xff] %vm1239, %v1397
      %1403 = vrot.lane.b32.xlu0 %v1208, 64
      %v1404 = vpop.permute.xlu0 %1403
      %v1409 = vunpack.c.l.b16 %v1147
      %v1410 = vunpack.c.l.b16 %v1148
      %v1411 = vunpack.c.l.b16 %v1149
      %v1412 = vunpack.c.l.b16 %v1150
      %v1413 = vpack.c.b16 %v1410, %v1409
      %v1414 = vpack.c.b16 %v1412, %v1411
      %v1418 = vsel %vm1221, %v1404, 0
      %1420 = vmatpush.bf16.msra.mxu0 0
      %1421 = vmatpush.bf16.msra.mxu0 0
      %1422 = vmatpush.bf16.msra.mxu0 0
      %1423 = vmatpush.bf16.msra.mxu0 0
      %1424 = vmatpush.bf16.msra.mxu0 0
      %1425 = vmatpush.bf16.msra.mxu0 0
      %1426 = vmatpush.bf16.msra.mxu0 %v1414
      %1427 = vmatpush.bf16.msra.mxu0 %v1413
      %1428 = vmatmul.bf16.gmra.mxu0 %v1418
      %v1429 = vpop.f32.mrf.mxu0
      %v1430 = vadd.f32 0.0, %v1429
      %v1431 = vpop.f32.mrf.mxu0
      %v1432 = vadd.f32 0.0, %v1431
      %1433 = vdwg.mxu0
      %s1434 = scalar_lea.vmem [#allocation2], 32
      %1435 = vst.msk [vmem:[%s1434] sm:$0xff] %vm1239, %v1430
      %1436 = vst.msk [vmem:[%s1434 + $0x8] sm:$0xff] %vm1239, %v1432
      %v1437 = vmax.f32 %v1339, %v1430
      %v1438 = vmax.f32 %v1340, %v1432
      %v1439 = vsel %vm1239, %v1430, -inf
      %1440 = vmax.xlane.f32.xlu0 %v1439
      %v1441 = vpop.xlane.xlu0 %1440
      %v1442 = vsel %vm1239, %v1432, -inf
      %1443 = vmax.xlane.f32.xlu0 %v1442
      %v1444 = vpop.xlane.xlu0 %1443
      %v1445 = vsub.f32 %v1430, %v1441
      %v1446 = vsub.f32 %v1432, %v1444
      %v1447 = vmul.f32 %v1445, 1.442695
      %v1448 = vpow.pop %v1447
      %v1449 = vmul.f32 %v1446, 1.442695
      %v1450 = vpow.pop %v1449
      %v1451 = vsel %vm1239, %v1448, 0.0
      %1452 = vadd.xlane.f32.xlu0 %v1451
      %v1453 = vpop.xlane.xlu0 %1452
      %v1454 = vsel %vm1239, %v1450, 0.0
      %1455 = vadd.xlane.f32.xlu0 %v1454
      %v1456 = vpop.xlane.xlu0 %1455
      %v1457 = vrcp.pop %v1453
      %v1458 = vrcp.pop %v1456
      %v1459 = vmul.f32 %v1448, %v1457
      %v1460 = vmul.f32 %v1450, %v1458
      %v1461 = vpack.c.bf16 %v1460, %v1459
      %v1466 = vunpack.c.l.b16 %v1195
      %v1467 = vunpack.c.l.b16 %v1196
      %v1468 = vunpack.c.l.b16 %v1197
      %v1469 = vunpack.c.l.b16 %v1198
      %v1470 = vpack.c.b16 %v1467, %v1466
      %v1471 = vpack.c.b16 %v1469, %v1468
      %v1473 = vsel %vm1275, %v1470, 0
      %v1476 = vsel %vm1275, %v1471, 0
      %1478 = vmatpush.bf16.msra.mxu0 0
      %1479 = vmatpush.bf16.msra.mxu0 0
      %1480 = vmatpush.bf16.msra.mxu0 0
      %1481 = vmatpush.bf16.msra.mxu0 0
      %1482 = vmatpush.bf16.msra.mxu0 0
      %1483 = vmatpush.bf16.msra.mxu0 0
      %1484 = vmatpush.bf16.msra.mxu0 0
      %1485 = vmatpush.bf16.msra.mxu0 %v1461
      %1486 = vmatmul.bf16.gmra.mxu0 %v1473
      %v1487 = vpop.f32.mrf.mxu0
      %v1488 = vadd.f32 0.0, %v1487
      %v1489 = vpop.f32.mrf.mxu0
      %v1490 = vadd.f32 0.0, %v1489
      %1491 = vmatmul.bf16.gmra.mxu0 %v1476
      %v1492 = vpop.f32.mrf.mxu0
      %v1493 = vadd.f32 0.0, %v1492
      %v1494 = vpop.f32.mrf.mxu0
      %v1495 = vadd.f32 0.0, %v1494
      %1496 = vdwg.mxu0
      %1497 = vst.msk [vmem:[#allocation3 + $0x40] sm:$0xff] %vm1239, %v1488
      %1498 = vst.msk [vmem:[#allocation3 + $0x48] sm:$0xff] %vm1239, %v1490
      %1499 = vst.msk [vmem:[#allocation3 + $0x50] sm:$0xff] %vm1239, %v1493
      %1500 = vst.msk [vmem:[#allocation3 + $0x58] sm:$0xff] %vm1239, %v1495
      %1501 = vrot.lane.b32.xlu0 %v1208, 32
      %v1502 = vpop.permute.xlu0 %1501
      %v1507 = vunpack.c.l.b16 %v1151
      %v1508 = vunpack.c.l.b16 %v1152
      %v1509 = vunpack.c.l.b16 %v1153
      %v1510 = vunpack.c.l.b16 %v1154
      %v1511 = vpack.c.b16 %v1508, %v1507
      %v1512 = vpack.c.b16 %v1510, %v1509
      %v1516 = vsel %vm1221, %v1502, 0
      %1518 = vmatpush.bf16.msra.mxu0 0
      %1519 = vmatpush.bf16.msra.mxu0 0
      %1520 = vmatpush.bf16.msra.mxu0 0
      %1521 = vmatpush.bf16.msra.mxu0 0
      %1522 = vmatpush.bf16.msra.mxu0 0
      %1523 = vmatpush.bf16.msra.mxu0 0
      %1524 = vmatpush.bf16.msra.mxu0 %v1512
      %1525 = vmatpush.bf16.msra.mxu0 %v1511
      %1526 = vmatmul.bf16.gmra.mxu0 %v1516
      %v1527 = vpop.f32.mrf.mxu0
      %v1528 = vadd.f32 0.0, %v1527
      %v1529 = vpop.f32.mrf.mxu0
      %v1530 = vadd.f32 0.0, %v1529
      %1531 = vdwg.mxu0
      %s1532 = scalar_lea.vmem [#allocation2], 48
      %1533 = vst.msk [vmem:[%s1532] sm:$0xff] %vm1239, %v1528
      %1534 = vst.msk [vmem:[%s1532 + $0x8] sm:$0xff] %vm1239, %v1530
      %v1535 = vmax.f32 %v1437, %v1528
      %v1536 = vmax.f32 %v1438, %v1530
      %v1537 = vsel %vm1239, %v1528, -inf
      %1538 = vmax.xlane.f32.xlu0 %v1537
      %v1539 = vpop.xlane.xlu0 %1538
      %v1540 = vsel %vm1239, %v1530, -inf
      %1541 = vmax.xlane.f32.xlu0 %v1540
      %v1542 = vpop.xlane.xlu0 %1541
      %v1543 = vsub.f32 %v1528, %v1539
      %v1544 = vsub.f32 %v1530, %v1542
      %v1545 = vmul.f32 %v1543, 1.442695
      %v1546 = vpow.pop %v1545
      %v1547 = vmul.f32 %v1544, 1.442695
      %v1548 = vpow.pop %v1547
      %v1549 = vsel %vm1239, %v1546, 0.0
      %1550 = vadd.xlane.f32.xlu0 %v1549
      %v1551 = vpop.xlane.xlu0 %1550
      %v1552 = vsel %vm1239, %v1548, 0.0
      %1553 = vadd.xlane.f32.xlu0 %v1552
      %v1554 = vpop.xlane.xlu0 %1553
      %v1555 = vrcp.pop %v1551
      %v1556 = vrcp.pop %v1554
      %v1557 = vmul.f32 %v1546, %v1555
      %v1558 = vmul.f32 %v1548, %v1556
      %v1559 = vpack.c.bf16 %v1558, %v1557
      %v1564 = vunpack.c.l.b16 %v1199
      %v1565 = vunpack.c.l.b16 %v1200
      %v1566 = vunpack.c.l.b16 %v1201
      %v1567 = vunpack.c.l.b16 %v1202
      %v1568 = vpack.c.b16 %v1565, %v1564
      %v1569 = vpack.c.b16 %v1567, %v1566
      %v1571 = vsel %vm1275, %v1568, 0
      %v1574 = vsel %vm1275, %v1569, 0
      %1576 = vmatpush.bf16.msra.mxu0 0
      %1577 = vmatpush.bf16.msra.mxu0 0
      %1578 = vmatpush.bf16.msra.mxu0 0
      %1579 = vmatpush.bf16.msra.mxu0 0
      %1580 = vmatpush.bf16.msra.mxu0 0
      %1581 = vmatpush.bf16.msra.mxu0 0
      %1582 = vmatpush.bf16.msra.mxu0 0
      %1583 = vmatpush.bf16.msra.mxu0 %v1559
      %1584 = vmatmul.bf16.gmra.mxu0 %v1571
      %v1585 = vpop.f32.mrf.mxu0
      %v1586 = vadd.f32 0.0, %v1585
      %v1587 = vpop.f32.mrf.mxu0
      %v1588 = vadd.f32 0.0, %v1587
      %1589 = vmatmul.bf16.gmra.mxu0 %v1574
      %v1590 = vpop.f32.mrf.mxu0
      %v1591 = vadd.f32 0.0, %v1590
      %v1592 = vpop.f32.mrf.mxu0
      %v1593 = vadd.f32 0.0, %v1592
      %1594 = vdwg.mxu0
      %1595 = vst.msk [vmem:[#allocation3 + $0x60] sm:$0xff] %vm1239, %v1586
      %1596 = vst.msk [vmem:[#allocation3 + $0x68] sm:$0xff] %vm1239, %v1588
      %1597 = vst.msk [vmem:[#allocation3 + $0x70] sm:$0xff] %vm1239, %v1591
      %1598 = vst.msk [vmem:[#allocation3 + $0x78] sm:$0xff] %vm1239, %v1593
      %v1599 = vld [vmem:[#allocation2] sm:$0xff]
      %v1600 = vld [vmem:[#allocation2 + $0x8] sm:$0xff]
      %v1601 = vsub.f32 %v1599, %v1535
      %v1602 = vsub.f32 %v1600, %v1536
      %v1603 = vmul.f32 %v1601, 1.442695
      %v1604 = vpow.pop %v1603
      %v1605 = vmul.f32 %v1602, 1.442695
      %v1606 = vpow.pop %v1605
      %1607 = vst.msk [vmem:[#allocation2] sm:$0xff] %vm1239, %v1604
      %1608 = vst.msk [vmem:[#allocation2 + $0x8] sm:$0xff] %vm1239, %v1606
      %v1609 = vadd.f32 %v1604, 0.0
      %v1610 = vadd.f32 %v1606, 0.0
      %v1611 = vld [vmem:[%s1336] sm:$0xff]
      %v1612 = vld [vmem:[%s1336 + $0x8] sm:$0xff]
      %v1613 = vsub.f32 %v1611, %v1535
      %v1614 = vsub.f32 %v1612, %v1536
      %v1615 = vmul.f32 %v1613, 1.442695
      %v1616 = vpow.pop %v1615
      %v1617 = vmul.f32 %v1614, 1.442695
      %v1618 = vpow.pop %v1617
      %1619 = vst.msk [vmem:[%s1336] sm:$0xff] %vm1239, %v1616
      %1620 = vst.msk [vmem:[%s1336 + $0x8] sm:$0xff] %vm1239, %v1618
      %v1621 = vadd.f32 %v1609, %v1616
      %v1622 = vadd.f32 %v1610, %v1618
      %v1623 = vld [vmem:[%s1434] sm:$0xff]
      %v1624 = vld [vmem:[%s1434 + $0x8] sm:$0xff]
      %v1625 = vsub.f32 %v1623, %v1535
      %v1626 = vsub.f32 %v1624, %v1536
      %v1627 = vmul.f32 %v1625, 1.442695
      %v1628 = vpow.pop %v1627
      %v1629 = vmul.f32 %v1626, 1.442695
      %v1630 = vpow.pop %v1629
      %1631 = vst.msk [vmem:[%s1434] sm:$0xff] %vm1239, %v1628
      %1632 = vst.msk [vmem:[%s1434 + $0x8] sm:$0xff] %vm1239, %v1630
      %v1633 = vadd.f32 %v1621, %v1628
      %v1634 = vadd.f32 %v1622, %v1630
      %v1635 = vld [vmem:[%s1532] sm:$0xff]
      %v1636 = vld [vmem:[%s1532 + $0x8] sm:$0xff]
      %v1637 = vsub.f32 %v1635, %v1535
      %v1638 = vsub.f32 %v1636, %v1536
      %v1639 = vmul.f32 %v1637, 1.442695
      %v1640 = vpow.pop %v1639
      %v1641 = vmul.f32 %v1638, 1.442695
      %v1642 = vpow.pop %v1641
      %1643 = vst.msk [vmem:[%s1532] sm:$0xff] %vm1239, %v1640
      %1644 = vst.msk [vmem:[%s1532 + $0x8] sm:$0xff] %vm1239, %v1642
      %v1645 = vadd.f32 %v1633, %v1640
      %v1646 = vadd.f32 %v1634, %v1642
      %v1647 = vrcp.pop %v1645
      %v1648 = vrcp.pop %v1646
      %v1649 = vld [vmem:[#allocation2] sm:$0xff]
      %v1650 = vld [vmem:[#allocation2 + $0x8] sm:$0xff]
      %v1651 = vmul.f32 %v1649, %v1647
      %v1652 = vmul.f32 %v1650, %v1648
      %v1653 = vpack.c.bf16 %v1652, %v1651
      %v1655 = vsel %vm1239, %v1653, 0
      %vm1657 = vcmask 1043456
      %v1659 = vsel %vm1657, %v1203, 0
      %1661 = vmatpush.bf16.msra.mxu0 0
      %1662 = vmatpush.bf16.msra.mxu0 0
      %1663 = vmatpush.bf16.msra.mxu0 0
      %1664 = vmatpush.bf16.msra.mxu0 0
      %1665 = vmatpush.bf16.msra.mxu0 0
      %1666 = vmatpush.bf16.msra.mxu0 0
      %1667 = vmatpush.bf16.msra.mxu0 0
      %1668 = vmatpush.bf16.msra.mxu0 %v1659
      %1669 = vmatmul.bf16.gmra.mxu0 %v1655
      %v1670 = vpop.f32.mrf.mxu0
      %v1671 = vadd.f32 0.0, %v1670
      %v1672 = vpop.f32.mrf.mxu0
      %v1673 = vadd.f32 0.0, %v1672
      %1674 = vdwg.mxu0
      %1675 = vst.msk [vmem:[#allocation4] sm:$0xff] %vm1221, %v1671
      %1676 = vst.msk [vmem:[#allocation4 + $0x8] sm:$0xff] %vm1221, %v1673
      %v1677 = vld [vmem:[%s1336] sm:$0xff]
      %v1678 = vld [vmem:[%s1336 + $0x8] sm:$0xff]
      %v1679 = vmul.f32 %v1677, %v1647
      %v1680 = vmul.f32 %v1678, %v1648
      %v1681 = vpack.c.bf16 %v1680, %v1679
      %v1683 = vunpack.c.l.b16 %v1203
      %v1684 = vpack.c.b16 %v1683, %v1683
      %1685 = vrot.lane.b32.xlu0 %v1684, 96
      %v1686 = vpop.permute.xlu0 %1685
      %v1688 = vsel %vm1239, %v1681, 0
      %v1691 = vsel %vm1657, %v1686, 0
      %1693 = vmatpush.bf16.msra.mxu0 0
      %1694 = vmatpush.bf16.msra.mxu0 0
      %1695 = vmatpush.bf16.msra.mxu0 0
      %1696 = vmatpush.bf16.msra.mxu0 0
      %1697 = vmatpush.bf16.msra.mxu0 0
      %1698 = vmatpush.bf16.msra.mxu0 0
      %1699 = vmatpush.bf16.msra.mxu0 0
      %1700 = vmatpush.bf16.msra.mxu0 %v1691
      %1701 = vmatmul.bf16.gmra.mxu0 %v1688
      %v1702 = vpop.f32.mrf.mxu0
      %v1703 = vadd.f32 0.0, %v1702
      %v1704 = vpop.f32.mrf.mxu0
      %v1705 = vadd.f32 0.0, %v1704
      %1706 = vdwg.mxu0
      %1709 = vrot.lane.b32.xlu0 %v1703, 32
      %v1710 = vpop.permute.xlu0 %1709
      %1711 = vrot.lane.b32.xlu0 %v1705, 32
      %v1712 = vpop.permute.xlu0 %1711
      %vm1715 = vcmask 523520
      %1716 = vst.msk [vmem:[#allocation4] sm:$0xff] %vm1715, %v1710
      %1717 = vst.msk [vmem:[#allocation4 + $0x8] sm:$0xff] %vm1715, %v1712
      %v1718 = vld [vmem:[%s1434] sm:$0xff]
      %v1719 = vld [vmem:[%s1434 + $0x8] sm:$0xff]
      %v1720 = vmul.f32 %v1718, %v1647
      %v1721 = vmul.f32 %v1719, %v1648
      %v1722 = vpack.c.bf16 %v1721, %v1720
      %1723 = vrot.lane.b32.xlu0 %v1684, 64
      %v1724 = vpop.permute.xlu0 %1723
      %v1726 = vsel %vm1239, %v1722, 0
      %v1729 = vsel %vm1657, %v1724, 0
      %1731 = vmatpush.bf16.msra.mxu0 0
      %1732 = vmatpush.bf16.msra.mxu0 0
      %1733 = vmatpush.bf16.msra.mxu0 0
      %1734 = vmatpush.bf16.msra.mxu0 0
      %1735 = vmatpush.bf16.msra.mxu0 0
      %1736 = vmatpush.bf16.msra.mxu0 0
      %1737 = vmatpush.bf16.msra.mxu0 0
      %1738 = vmatpush.bf16.msra.mxu0 %v1729
      %1739 = vmatmul.bf16.gmra.mxu0 %v1726
      %v1740 = vpop.f32.mrf.mxu0
      %v1741 = vadd.f32 0.0, %v1740
      %v1742 = vpop.f32.mrf.mxu0
      %v1743 = vadd.f32 0.0, %v1742
      %1744 = vdwg.mxu0
      %1747 = vrot.lane.b32.xlu0 %v1741, 64
      %v1748 = vpop.permute.xlu0 %1747
      %1749 = vrot.lane.b32.xlu0 %v1743, 64
      %v1750 = vpop.permute.xlu0 %1749
      %vm1753 = vcmask 785920
      %1754 = vst.msk [vmem:[#allocation4] sm:$0xff] %vm1753, %v1748
      %1755 = vst.msk [vmem:[#allocation4 + $0x8] sm:$0xff] %vm1753, %v1750
      %v1756 = vld [vmem:[%s1532] sm:$0xff]
      %v1757 = vld [vmem:[%s1532 + $0x8] sm:$0xff]
      %v1758 = vmul.f32 %v1756, %v1647
      %v1759 = vmul.f32 %v1757, %v1648
      %v1760 = vpack.c.bf16 %v1759, %v1758
      %1761 = vrot.lane.b32.xlu0 %v1684, 32
      %v1762 = vpop.permute.xlu0 %1761
      %v1764 = vsel %vm1239, %v1760, 0
      %v1767 = vsel %vm1657, %v1762, 0
      %1769 = vmatpush.bf16.msra.mxu0 0
      %1770 = vmatpush.bf16.msra.mxu0 0
      %1771 = vmatpush.bf16.msra.mxu0 0
      %1772 = vmatpush.bf16.msra.mxu0 0
      %1773 = vmatpush.bf16.msra.mxu0 0
      %1774 = vmatpush.bf16.msra.mxu0 0
      %1775 = vmatpush.bf16.msra.mxu0 0
      %1776 = vmatpush.bf16.msra.mxu0 %v1767
      %1777 = vmatmul.bf16.gmra.mxu0 %v1764
      %v1778 = vpop.f32.mrf.mxu0
      %v1779 = vadd.f32 0.0, %v1778
      %v1780 = vpop.f32.mrf.mxu0
      %v1781 = vadd.f32 0.0, %v1780
      %1782 = vdwg.mxu0
      %1785 = vrot.lane.b32.xlu0 %v1779, 96
      %v1786 = vpop.permute.xlu0 %1785
      %1787 = vrot.lane.b32.xlu0 %v1781, 96
      %v1788 = vpop.permute.xlu0 %1787
      %vm1791 = vcmask 1048320
      %1792 = vst.msk [vmem:[#allocation4] sm:$0xff] %vm1791, %v1786
      %1793 = vst.msk [vmem:[#allocation4 + $0x8] sm:$0xff] %vm1791, %v1788
      %v1794 = vld [vmem:[#allocation3] sm:$0xff]
      %v1795 = vld [vmem:[#allocation3 + $0x8] sm:$0xff]
      %v1796 = vld [vmem:[#allocation3 + $0x10] sm:$0xff]
      %v1797 = vld [vmem:[#allocation3 + $0x18] sm:$0xff]
      %v1798 = vld [vmem:[#allocation3 + $0x20] sm:$0xff]
      %v1799 = vld [vmem:[#allocation3 + $0x28] sm:$0xff]
      %v1800 = vld [vmem:[#allocation3 + $0x30] sm:$0xff]
      %v1801 = vld [vmem:[#allocation3 + $0x38] sm:$0xff]
      %v1802 = vld [vmem:[#allocation3 + $0x40] sm:$0xff]
      %v1803 = vld [vmem:[#allocation3 + $0x48] sm:$0xff]
      %v1804 = vld [vmem:[#allocation3 + $0x50] sm:$0xff]
      %v1805 = vld [vmem:[#allocation3 + $0x58] sm:$0xff]
      %v1806 = vld [vmem:[#allocation3 + $0x60] sm:$0xff]
      %v1807 = vld [vmem:[#allocation3 + $0x68] sm:$0xff]
      %v1808 = vld [vmem:[#allocation3 + $0x70] sm:$0xff]
      %v1809 = vld [vmem:[#allocation3 + $0x78] sm:$0xff]
      %1810 = vxpose.xlu0.b32.start [1/16] %v1794, 128
      %1811 = vxpose.xlu0.b32.cont [2/16] %v1795, 128
      %1812 = vxpose.xlu0.b32.cont [3/16] %v1796, 128
      %1813 = vxpose.xlu0.b32.cont [4/16] %v1797, 128
      %1814 = vxpose.xlu0.b32.cont [5/16] %v1798, 128
      %1815 = vxpose.xlu0.b32.cont [6/16] %v1799, 128
      %1816 = vxpose.xlu0.b32.cont [7/16] %v1800, 128
      %1817 = vxpose.xlu0.b32.cont [8/16] %v1801, 128
      %1818 = vxpose.xlu0.b32.cont [9/16] %v1802, 128
      %1819 = vxpose.xlu0.b32.cont [10/16] %v1803, 128
      %1820 = vxpose.xlu0.b32.cont [11/16] %v1804, 128
      %1821 = vxpose.xlu0.b32.cont [12/16] %v1805, 128
      %1822 = vxpose.xlu0.b32.cont [13/16] %v1806, 128
      %1823 = vxpose.xlu0.b32.cont [14/16] %v1807, 128
      %1824 = vxpose.xlu0.b32.cont [15/16] %v1808, 128
      %1825 = vxpose.xlu0.b32.end [16/16] %v1809, 128
      %v1826 = vpop.trf.xlu0
      %v1827 = vpop.trf.xlu0
      %v1828 = vpop.trf.xlu0
      %v1829 = vpop.trf.xlu0
      %v1830 = vpop.trf.xlu0
      %v1831 = vpop.trf.xlu0
      %v1832 = vpop.trf.xlu0
      %v1833 = vpop.trf.xlu0
      %v1834 = vpop.trf.xlu0
      %v1835 = vpop.trf.xlu0
      %v1836 = vpop.trf.xlu0
      %v1837 = vpop.trf.xlu0
      %v1838 = vpop.trf.xlu0
      %v1839 = vpop.trf.xlu0
      %v1840 = vpop.trf.xlu0
      %v1841 = vpop.trf.xlu0
      %v1842 = vpack.c.bf16 %v1826, %v1826
      %v1843 = vld [vmem:[%s8] sm:$0xf]
      %v1844 = vld [vmem:[%s8 + $0x4] sm:$0xf]
      %v1845 = vld [vmem:[%s8 + $0x8] sm:$0xf]
      %v1846 = vld [vmem:[%s8 + $0xc] sm:$0xf]
      %v1847 = vld [vmem:[%s8 + $0x10] sm:$0xf]
      %v1848 = vld [vmem:[%s8 + $0x14] sm:$0xf]
      %v1849 = vld [vmem:[%s8 + $0x18] sm:$0xf]
      %v1850 = vld [vmem:[%s8 + $0x1c] sm:$0xf]
      %v1851 = vld [vmem:[%s8 + $0x20] sm:$0xf]
      %v1852 = vld [vmem:[%s8 + $0x24] sm:$0xf]
      %v1853 = vld [vmem:[%s8 + $0x28] sm:$0xf]
      %v1854 = vld [vmem:[%s8 + $0x2c] sm:$0xf]
      %v1855 = vld [vmem:[%s8 + $0x30] sm:$0xf]
      %v1856 = vld [vmem:[%s8 + $0x34] sm:$0xf]
      %v1857 = vld [vmem:[%s8 + $0x38] sm:$0xf]
      %v1858 = vld [vmem:[%s8 + $0x3c] sm:$0xf]
      %v1859 = vld [vmem:[%s9] sm:$0x1]
      %v1861 = vperm.slane %v1859, 0
      %v1879 = vunpack.c.l.b16 %v1843
      %v1880 = vunpack.c.l.b16 %v1844
      %v1881 = vunpack.c.l.b16 %v1845
      %v1882 = vunpack.c.l.b16 %v1846
      %v1883 = vunpack.c.l.b16 %v1847
      %v1884 = vunpack.c.l.b16 %v1848
      %v1885 = vunpack.c.l.b16 %v1849
      %v1886 = vunpack.c.l.b16 %v1850
      %v1887 = vunpack.c.l.b16 %v1851
      %v1888 = vunpack.c.l.b16 %v1852
      %v1889 = vunpack.c.l.b16 %v1853
      %v1890 = vunpack.c.l.b16 %v1854
      %v1891 = vunpack.c.l.b16 %v1855
      %v1892 = vunpack.c.l.b16 %v1856
      %v1893 = vunpack.c.l.b16 %v1857
      %v1894 = vunpack.c.l.b16 %v1858
      %v1895 = vpack.c.b16 %v1880, %v1879
      %v1896 = vpack.c.b16 %v1882, %v1881
      %v1897 = vpack.c.b16 %v1884, %v1883
      %v1898 = vpack.c.b16 %v1886, %v1885
      %v1899 = vpack.c.b16 %v1888, %v1887
      %v1900 = vpack.c.b16 %v1890, %v1889
      %v1901 = vpack.c.b16 %v1892, %v1891
      %v1902 = vpack.c.b16 %v1894, %v1893
      %1911 = vmatpush.bf16.msra.mxu0 %v1902
      %1912 = vmatpush.bf16.msra.mxu0 %v1901
      %1913 = vmatpush.bf16.msra.mxu0 %v1900
      %1914 = vmatpush.bf16.msra.mxu0 %v1899
      %1915 = vmatpush.bf16.msra.mxu0 %v1898
      %1916 = vmatpush.bf16.msra.mxu0 %v1897
      %1917 = vmatpush.bf16.msra.mxu0 %v1896
      %1918 = vmatpush.bf16.msra.mxu0 %v1895
      %1919 = vmatmul.bf16.gmra.mxu0 %v1842
      %v1920 = vpop.f32.mrf.mxu0
      %v1921 = vadd.f32 %v1861, %v1920
      %v1922 = vpop.f32.mrf.mxu0
      %1923 = vdwg.mxu0
      %v1924 = vld [vmem:[#allocation4] sm:$0xff]
      %v1925 = vld [vmem:[#allocation4 + $0x8] sm:$0xff]
      %v1926 = vpack.c.bf16 %v1925, %v1924
      %v1927 = vld [vmem:[%s10] sm:$0xf]
      %v1928 = vld [vmem:[%s10 + $0x4] sm:$0xf]
      %v1929 = vld [vmem:[%s10 + $0x8] sm:$0xf]
      %v1930 = vld [vmem:[%s10 + $0xc] sm:$0xf]
      %v1931 = vld [vmem:[%s10 + $0x10] sm:$0xf]
      %v1932 = vld [vmem:[%s10 + $0x14] sm:$0xf]
      %v1933 = vld [vmem:[%s10 + $0x18] sm:$0xf]
      %v1934 = vld [vmem:[%s10 + $0x1c] sm:$0xf]
      %v1935 = vld [vmem:[%s10 + $0x20] sm:$0xf]
      %v1936 = vld [vmem:[%s10 + $0x24] sm:$0xf]
      %v1937 = vld [vmem:[%s10 + $0x28] sm:$0xf]
      %v1938 = vld [vmem:[%s10 + $0x2c] sm:$0xf]
      %v1939 = vld [vmem:[%s10 + $0x30] sm:$0xf]
      %v1940 = vld [vmem:[%s10 + $0x34] sm:$0xf]
      %v1941 = vld [vmem:[%s10 + $0x38] sm:$0xf]
      %v1942 = vld [vmem:[%s10 + $0x3c] sm:$0xf]
      %v1943 = vld [vmem:[%s11] sm:$0x1]
      %v1945 = vperm.slane %v1943, 0
      %v1963 = vunpack.c.l.b16 %v1927
      %v1964 = vunpack.c.l.b16 %v1928
      %v1965 = vunpack.c.l.b16 %v1929
      %v1966 = vunpack.c.l.b16 %v1930
      %v1967 = vunpack.c.l.b16 %v1931
      %v1968 = vunpack.c.l.b16 %v1932
      %v1969 = vunpack.c.l.b16 %v1933
      %v1970 = vunpack.c.l.b16 %v1934
      %v1971 = vunpack.c.l.b16 %v1935
      %v1972 = vunpack.c.l.b16 %v1936
      %v1973 = vunpack.c.l.b16 %v1937
      %v1974 = vunpack.c.l.b16 %v1938
      %v1975 = vunpack.c.l.b16 %v1939
      %v1976 = vunpack.c.l.b16 %v1940
      %v1977 = vunpack.c.l.b16 %v1941
      %v1978 = vunpack.c.l.b16 %v1942
      %v1979 = vpack.c.b16 %v1964, %v1963
      %v1980 = vpack.c.b16 %v1966, %v1965
      %v1981 = vpack.c.b16 %v1968, %v1967
      %v1982 = vpack.c.b16 %v1970, %v1969
      %v1983 = vpack.c.b16 %v1972, %v1971
      %v1984 = vpack.c.b16 %v1974, %v1973
      %v1985 = vpack.c.b16 %v1976, %v1975
      %v1986 = vpack.c.b16 %v1978, %v1977
      %1995 = vmatpush.bf16.msra.mxu0 %v1986
      %1996 = vmatpush.bf16.msra.mxu0 %v1985
      %1997 = vmatpush.bf16.msra.mxu0 %v1984
      %1998 = vmatpush.bf16.msra.mxu0 %v1983
      %1999 = vmatpush.bf16.msra.mxu0 %v1982
      %2000 = vmatpush.bf16.msra.mxu0 %v1981
      %2001 = vmatpush.bf16.msra.mxu0 %v1980
      %2002 = vmatpush.bf16.msra.mxu0 %v1979
      %2003 = vmatmul.bf16.gmra.mxu0 %v1926
      %v2004 = vpop.f32.mrf.mxu0
      %v2005 = vadd.f32 %v1945, %v2004
      %v2006 = vpop.f32.mrf.mxu0
      %v2007 = vadd.f32 %v1945, %v2006
      %2008 = vdwg.mxu0
      %v2009 = vld [vmem:[%s12] sm:$0xf]
      %v2010 = vld [vmem:[%s12 + $0x4] sm:$0xf]
      %v2011 = vld [vmem:[%s12 + $0x8] sm:$0xf]
      %v2012 = vld [vmem:[%s12 + $0xc] sm:$0xf]
      %v2013 = vld [vmem:[%s12 + $0x10] sm:$0xf]
      %v2014 = vld [vmem:[%s12 + $0x14] sm:$0xf]
      %v2015 = vld [vmem:[%s12 + $0x18] sm:$0xf]
      %v2016 = vld [vmem:[%s12 + $0x1c] sm:$0xf]
      %v2017 = vld [vmem:[%s12 + $0x20] sm:$0xf]
      %v2018 = vld [vmem:[%s12 + $0x24] sm:$0xf]
      %v2019 = vld [vmem:[%s12 + $0x28] sm:$0xf]
      %v2020 = vld [vmem:[%s12 + $0x2c] sm:$0xf]
      %v2021 = vld [vmem:[%s12 + $0x30] sm:$0xf]
      %v2022 = vld [vmem:[%s12 + $0x34] sm:$0xf]
      %v2023 = vld [vmem:[%s12 + $0x38] sm:$0xf]
      %v2024 = vld [vmem:[%s12 + $0x3c] sm:$0xf]
      %v2025 = vpack.c.bf16 %v1921, %v1921
      %v2026 = vld [vmem:[%s13] sm:$0xf]
      %v2027 = vld [vmem:[%s13 + $0x4] sm:$0xf]
      %v2028 = vld [vmem:[%s13 + $0x8] sm:$0xf]
      %v2029 = vld [vmem:[%s13 + $0xc] sm:$0xf]
      %v2030 = vld [vmem:[%s13 + $0x10] sm:$0xf]
      %v2031 = vld [vmem:[%s13 + $0x14] sm:$0xf]
      %v2032 = vld [vmem:[%s13 + $0x18] sm:$0xf]
      %v2033 = vld [vmem:[%s13 + $0x1c] sm:$0xf]
      %v2034 = vld [vmem:[%s13 + $0x20] sm:$0xf]
      %v2035 = vld [vmem:[%s13 + $0x24] sm:$0xf]
      %v2036 = vld [vmem:[%s13 + $0x28] sm:$0xf]
      %v2037 = vld [vmem:[%s13 + $0x2c] sm:$0xf]
      %v2038 = vld [vmem:[%s13 + $0x30] sm:$0xf]
      %v2039 = vld [vmem:[%s13 + $0x34] sm:$0xf]
      %v2040 = vld [vmem:[%s13 + $0x38] sm:$0xf]
      %v2041 = vld [vmem:[%s13 + $0x3c] sm:$0xf]
      %v2058 = vunpack.c.l.b16 %v2026
      %v2059 = vunpack.c.l.b16 %v2027
      %v2060 = vunpack.c.l.b16 %v2028
      %v2061 = vunpack.c.l.b16 %v2029
      %v2062 = vunpack.c.l.b16 %v2030
      %v2063 = vunpack.c.l.b16 %v2031
      %v2064 = vunpack.c.l.b16 %v2032
      %v2065 = vunpack.c.l.b16 %v2033
      %v2066 = vunpack.c.l.b16 %v2034
      %v2067 = vunpack.c.l.b16 %v2035
      %v2068 = vunpack.c.l.b16 %v2036
      %v2069 = vunpack.c.l.b16 %v2037
      %v2070 = vunpack.c.l.b16 %v2038
      %v2071 = vunpack.c.l.b16 %v2039
      %v2072 = vunpack.c.l.b16 %v2040
      %v2073 = vunpack.c.l.b16 %v2041
      %v2074 = vpack.c.b16 %v2059, %v2058
      %v2075 = vpack.c.b16 %v2061, %v2060
      %v2076 = vpack.c.b16 %v2063, %v2062
      %v2077 = vpack.c.b16 %v2065, %v2064
      %v2078 = vpack.c.b16 %v2067, %v2066
      %v2079 = vpack.c.b16 %v2069, %v2068
      %v2080 = vpack.c.b16 %v2071, %v2070
      %v2081 = vpack.c.b16 %v2073, %v2072
      %2090 = vmatpush.bf16.msra.mxu0 %v2081
      %2091 = vmatpush.bf16.msra.mxu0 %v2080
      %2092 = vmatpush.bf16.msra.mxu0 %v2079
      %2093 = vmatpush.bf16.msra.mxu0 %v2078
      %2094 = vmatpush.bf16.msra.mxu0 %v2077
      %2095 = vmatpush.bf16.msra.mxu0 %v2076
      %2096 = vmatpush.bf16.msra.mxu0 %v2075
      %2097 = vmatpush.bf16.msra.mxu0 %v2074
      %2098 = vmatmul.bf16.gmra.mxu0 %v2025
      %v2099 = vpop.f32.mrf.mxu0
      %v2100 = vadd.f32 0.0, %v2099
      %v2101 = vpop.f32.mrf.mxu0
      %2102 = vdwg.mxu0
      %v2119 = vunpack.c.l.b16 %v2009
      %v2120 = vunpack.c.l.b16 %v2010
      %v2121 = vunpack.c.l.b16 %v2011
      %v2122 = vunpack.c.l.b16 %v2012
      %v2123 = vunpack.c.l.b16 %v2013
      %v2124 = vunpack.c.l.b16 %v2014
      %v2125 = vunpack.c.l.b16 %v2015
      %v2126 = vunpack.c.l.b16 %v2016
      %v2127 = vunpack.c.l.b16 %v2017
      %v2128 = vunpack.c.l.b16 %v2018
      %v2129 = vunpack.c.l.b16 %v2019
      %v2130 = vunpack.c.l.b16 %v2020
      %v2131 = vunpack.c.l.b16 %v2021
      %v2132 = vunpack.c.l.b16 %v2022
      %v2133 = vunpack.c.l.b16 %v2023
      %v2134 = vunpack.c.l.b16 %v2024
      %v2135 = vpack.c.b16 %v2120, %v2119
      %v2136 = vpack.c.b16 %v2122, %v2121
      %v2137 = vpack.c.b16 %v2124, %v2123
      %v2138 = vpack.c.b16 %v2126, %v2125
      %v2139 = vpack.c.b16 %v2128, %v2127
      %v2140 = vpack.c.b16 %v2130, %v2129
      %v2141 = vpack.c.b16 %v2132, %v2131
      %v2142 = vpack.c.b16 %v2134, %v2133
      %2151 = vmatpush.bf16.msra.mxu0 %v2142
      %2152 = vmatpush.bf16.msra.mxu0 %v2141
      %2153 = vmatpush.bf16.msra.mxu0 %v2140
      %2154 = vmatpush.bf16.msra.mxu0 %v2139
      %2155 = vmatpush.bf16.msra.mxu0 %v2138
      %2156 = vmatpush.bf16.msra.mxu0 %v2137
      %2157 = vmatpush.bf16.msra.mxu0 %v2136
      %2158 = vmatpush.bf16.msra.mxu0 %v2135
      %2159 = vmatmul.bf16.gmra.mxu0 %v772
      %v2160 = vpop.f32.mrf.mxu0
      %v2161 = vadd.f32 %v2100, %v2160
      %v2162 = vpop.f32.mrf.mxu0
      %2163 = vdwg.mxu0
      %v2164 = vld [vmem:[%s14] sm:$0x1]
      %v2166 = vperm.slane %v2164, 0
      %v2168 = vadd.f32 %v2161, %v2166
      %v2169 = vtanh.pop %v2168
      %v2170 = vld [vmem:[%s15] sm:$0xf]
      %v2171 = vld [vmem:[%s15 + $0x4] sm:$0xf]
      %v2172 = vld [vmem:[%s15 + $0x8] sm:$0xf]
      %v2173 = vld [vmem:[%s15 + $0xc] sm:$0xf]
      %v2174 = vld [vmem:[%s15 + $0x10] sm:$0xf]
      %v2175 = vld [vmem:[%s15 + $0x14] sm:$0xf]
      %v2176 = vld [vmem:[%s15 + $0x18] sm:$0xf]
      %v2177 = vld [vmem:[%s15 + $0x1c] sm:$0xf]
      %v2178 = vld [vmem:[%s15 + $0x20] sm:$0xf]
      %v2179 = vld [vmem:[%s15 + $0x24] sm:$0xf]
      %v2180 = vld [vmem:[%s15 + $0x28] sm:$0xf]
      %v2181 = vld [vmem:[%s15 + $0x2c] sm:$0xf]
      %v2182 = vld [vmem:[%s15 + $0x30] sm:$0xf]
      %v2183 = vld [vmem:[%s15 + $0x34] sm:$0xf]
      %v2184 = vld [vmem:[%s15 + $0x38] sm:$0xf]
      %v2185 = vld [vmem:[%s15 + $0x3c] sm:$0xf]
      %v2186 = vpack.c.bf16 %v2007, %v2005
      %v2187 = vld [vmem:[%s16] sm:$0xf]
      %v2188 = vld [vmem:[%s16 + $0x4] sm:$0xf]
      %v2189 = vld [vmem:[%s16 + $0x8] sm:$0xf]
      %v2190 = vld [vmem:[%s16 + $0xc] sm:$0xf]
      %v2191 = vld [vmem:[%s16 + $0x10] sm:$0xf]
      %v2192 = vld [vmem:[%s16 + $0x14] sm:$0xf]
      %v2193 = vld [vmem:[%s16 + $0x18] sm:$0xf]
      %v2194 = vld [vmem:[%s16 + $0x1c] sm:$0xf]
      %v2195 = vld [vmem:[%s16 + $0x20] sm:$0xf]
      %v2196 = vld [vmem:[%s16 + $0x24] sm:$0xf]
      %v2197 = vld [vmem:[%s16 + $0x28] sm:$0xf]
      %v2198 = vld [vmem:[%s16 + $0x2c] sm:$0xf]
      %v2199 = vld [vmem:[%s16 + $0x30] sm:$0xf]
      %v2200 = vld [vmem:[%s16 + $0x34] sm:$0xf]
      %v2201 = vld [vmem:[%s16 + $0x38] sm:$0xf]
      %v2202 = vld [vmem:[%s16 + $0x3c] sm:$0xf]
      %v2219 = vunpack.c.l.b16 %v2187
      %v2220 = vunpack.c.l.b16 %v2188
      %v2221 = vunpack.c.l.b16 %v2189
      %v2222 = vunpack.c.l.b16 %v2190
      %v2223 = vunpack.c.l.b16 %v2191
      %v2224 = vunpack.c.l.b16 %v2192
      %v2225 = vunpack.c.l.b16 %v2193
      %v2226 = vunpack.c.l.b16 %v2194
      %v2227 = vunpack.c.l.b16 %v2195
      %v2228 = vunpack.c.l.b16 %v2196
      %v2229 = vunpack.c.l.b16 %v2197
      %v2230 = vunpack.c.l.b16 %v2198
      %v2231 = vunpack.c.l.b16 %v2199
      %v2232 = vunpack.c.l.b16 %v2200
      %v2233 = vunpack.c.l.b16 %v2201
      %v2234 = vunpack.c.l.b16 %v2202
      %v2235 = vpack.c.b16 %v2220, %v2219
      %v2236 = vpack.c.b16 %v2222, %v2221
      %v2237 = vpack.c.b16 %v2224, %v2223
      %v2238 = vpack.c.b16 %v2226, %v2225
      %v2239 = vpack.c.b16 %v2228, %v2227
      %v2240 = vpack.c.b16 %v2230, %v2229
      %v2241 = vpack.c.b16 %v2232, %v2231
      %v2242 = vpack.c.b16 %v2234, %v2233
      %2251 = vmatpush.bf16.msra.mxu0 %v2242
      %2252 = vmatpush.bf16.msra.mxu0 %v2241
      %2253 = vmatpush.bf16.msra.mxu0 %v2240
      %2254 = vmatpush.bf16.msra.mxu0 %v2239
      %2255 = vmatpush.bf16.msra.mxu0 %v2238
      %2256 = vmatpush.bf16.msra.mxu0 %v2237
      %2257 = vmatpush.bf16.msra.mxu0 %v2236
      %2258 = vmatpush.bf16.msra.mxu0 %v2235
      %2259 = vmatmul.bf16.gmra.mxu0 %v2186
      %v2260 = vpop.f32.mrf.mxu0
      %v2261 = vadd.f32 0.0, %v2260
      %v2262 = vpop.f32.mrf.mxu0
      %v2263 = vadd.f32 0.0, %v2262
      %2264 = vdwg.mxu0
      %v2281 = vunpack.c.l.b16 %v2170
      %v2282 = vunpack.c.l.b16 %v2171
      %v2283 = vunpack.c.l.b16 %v2172
      %v2284 = vunpack.c.l.b16 %v2173
      %v2285 = vunpack.c.l.b16 %v2174
      %v2286 = vunpack.c.l.b16 %v2175
      %v2287 = vunpack.c.l.b16 %v2176
      %v2288 = vunpack.c.l.b16 %v2177
      %v2289 = vunpack.c.l.b16 %v2178
      %v2290 = vunpack.c.l.b16 %v2179
      %v2291 = vunpack.c.l.b16 %v2180
      %v2292 = vunpack.c.l.b16 %v2181
      %v2293 = vunpack.c.l.b16 %v2182
      %v2294 = vunpack.c.l.b16 %v2183
      %v2295 = vunpack.c.l.b16 %v2184
      %v2296 = vunpack.c.l.b16 %v2185
      %v2297 = vpack.c.b16 %v2282, %v2281
      %v2298 = vpack.c.b16 %v2284, %v2283
      %v2299 = vpack.c.b16 %v2286, %v2285
      %v2300 = vpack.c.b16 %v2288, %v2287
      %v2301 = vpack.c.b16 %v2290, %v2289
      %v2302 = vpack.c.b16 %v2292, %v2291
      %v2303 = vpack.c.b16 %v2294, %v2293
      %v2304 = vpack.c.b16 %v2296, %v2295
      %2313 = vmatpush.bf16.msra.mxu0 %v2304
      %2314 = vmatpush.bf16.msra.mxu0 %v2303
      %2315 = vmatpush.bf16.msra.mxu0 %v2302
      %2316 = vmatpush.bf16.msra.mxu0 %v2301
      %2317 = vmatpush.bf16.msra.mxu0 %v2300
      %2318 = vmatpush.bf16.msra.mxu0 %v2299
      %2319 = vmatpush.bf16.msra.mxu0 %v2298
      %2320 = vmatpush.bf16.msra.mxu0 %v2297
      %2321 = vmatmul.bf16.gmra.mxu0 %v797
      %v2322 = vpop.f32.mrf.mxu0
      %v2323 = vadd.f32 %v2261, %v2322
      %v2324 = vpop.f32.mrf.mxu0
      %v2325 = vadd.f32 %v2263, %v2324
      %2326 = vdwg.mxu0
      %v2327 = vld [vmem:[%s17] sm:$0x1]
      %v2329 = vperm.slane %v2327, 0
      %v2331 = vadd.f32 %v2323, %v2329
      %v2332 = vadd.f32 %v2325, %v2329
      %v2333 = vtanh.pop %v2331
      %v2334 = vtanh.pop %v2332
      %2335 = vst [vmem:[%s715] sm:$0xff] %v2169
      %2336 = vst [vmem:[%s711] sm:$0xff] %v2333
      %2337 = vst [vmem:[%s711 + $0x8] sm:$0xff] %v2334
      %p2338 = scmp.lt.s32.totalorder %s33, 1
      %s2339 = scalar_select %p2338, %s33, 1
      %s2340 = smul.addr %s2339, 2
      %s2341 = smul.addr %s2340, 8
      %s2342 = scalar_lea.vmem %s20, %s2341
      %p2343 = scmp.lt.s32.totalorder %s33, 1
      %s2344 = scalar_select %p2343, %s33, 1
      %s2345 = smul.addr %s2344, 8
      %s2346 = scalar_lea.vmem %s21, %s2345
      // Predicated region
      $region101: #{mhco_forward.2} parent=99 // pred_check
        %p2347 = pneg %p485
      $region102: #{mhco_forward.2} parent=99 // pred_check_branch
        %2349 = sbr.rel (%p2347) target = $region104
      $region103: #{mhco_forward.2} parent=99 // pred_region
        _
      $region104: #{mhco_forward.2} parent=99 // pred_fallthru
        _
      // Predicated region
      $region105: #{mhco_forward.2} parent=99 // pred_check
        %p2350 = pneg %p511
      $region106: #{mhco_forward.2} parent=99 // pred_check_branch
        %2352 = sbr.rel (%p2350) target = $region108
      $region107: #{mhco_forward.2} parent=99 // pred_region
        _
      $region108: #{mhco_forward.2} parent=99 // pred_fallthru
        _
    $region100: #{mhco_forward.2} parent=5 // pred_fallthru
      _
    %p2353 = scmp.le.s32.totalorder 2, %s28
    // Predicated region
    $region109: #{mhco_forward.2} parent=5 // pred_check
      %p2354 = pneg %p2353
    $region110: #{mhco_forward.2} parent=5 // pred_check_branch
      %2356 = sbr.rel (%p2354) target = $region112
    $region111: #{mhco_forward.2} parent=5 // pred_region
      %s2357 = ssub.s32 %s28, 2
      // Predicated region
      $region113: #{mhco_forward.2} parent=111 // pred_check
        %p2358 = pneg %p491
      $region114: #{mhco_forward.2} parent=111 // pred_check_branch
        %2360 = sbr.rel (%p2358) target = $region116
      $region115: #{mhco_forward.2} parent=111 // pred_region
        %p2361 = scmp.lt.s32.totalorder %s34, 1
        %s2362 = scalar_select %p2361, %s34, 1
        %s2363 = smul.addr %s2362, 2
        %s2364 = smul.addr %s2363, 8
        %s2365 = scalar_lea.vmem %s20, %s2364
      $region116: #{mhco_forward.2} parent=111 // pred_fallthru
        _
      // Predicated region
      $region117: #{mhco_forward.2} parent=111 // pred_check
        %p2366 = pneg %p517
      $region118: #{mhco_forward.2} parent=111 // pred_check_branch
        %2368 = sbr.rel (%p2366) target = $region120
      $region119: #{mhco_forward.2} parent=111 // pred_region
        %p2369 = scmp.lt.s32.totalorder %s34, 1
        %s2370 = scalar_select %p2369, %s34, 1
        %s2371 = smul.addr %s2370, 8
        %s2372 = scalar_lea.vmem %s21, %s2371
      $region120: #{mhco_forward.2} parent=111 // pred_fallthru
        _
    $region112: #{mhco_forward.2} parent=5 // pred_fallthru
      _
  $region6: #{mhco_forward.2} parent=0 // loop_footer
    %s32 = sadd.s32 1, %s28
  $region7: #{mhco_forward.2} parent=0 // loop_footer_branch
    %27 = sbr.rel target = $region3
  $region8: #{mhco_forward.2} parent=0 // loop_exit
    _

</llo_original>
